<compile_context>
chip_gen: v6e
topology: v6e:2x2x1
jax: 0.10.0
libtpu: 0.0.40
codegen_flags: <defaults>
</compile_context>

<pallas_src>
import jax
import jax.numpy as jnp
from jax.experimental import pallas as pl
from jax.experimental.pallas import tpu as pltpu


# --------------------------------------------------------------------------------------
# Kernels
# --------------------------------------------------------------------------------------
def _encoder_pool(x_ref, e_ref, u_ref, g_ref, s_ref, wx_ref, we_ref, wu_ref, bf_ref):
    """Encoder matmuls + gated, length-masked mean pooling for a TB-item block.

    x_ref: (TB*N, Dx)   e_ref: (TB*N, De)   u_ref: (TB, Du)
    g_ref: (TB, N)      s_ref: (TB, N)  [precomputed mask/denom scale, f32]
    wx/we/wu: (D*, Hp)  bf_ref: (1, Hp)
    returns pooled: (TB, Hp) f32
    """
    TB, N = g_ref.shape
    Hp = wx_ref.shape[1]

    # Two big MXU dots over the (TB*N)-row block + one tiny per-item dot for u.
    h = jnp.dot(x_ref[...], wx_ref[...], preferred_element_type=jnp.float32)
    h = h + jnp.dot(e_ref[...], we_ref[...], preferred_element_type=jnp.float32)
    hu = jnp.dot(u_ref[...], wu_ref[...], preferred_element_type=jnp.float32)   # (TB, Hp)

    h = h.reshape(TB, N, Hp) + hu[:, None, :] + bf_ref[...][None]               # broadcast u over N
    h = jnp.maximum(h, 0.0)

    # Pooling weight: sigmoid gate * (mask / denom) -- mask/denom precomputed in wrapper.
    w = jax.nn.sigmoid(g_ref[...].astype(jnp.float32)) * s_ref[...]             # (TB, N)

    # Gated, masked mean-pool on the VPU/XLU (MXU stays free): (TB,N,Hp)*(TB,N,1) -> sum_N.
    return jnp.sum(h * w[:, :, None], axis=1)                                   # (TB, Hp)


def _feat_kernel(x_ref, e_ref, u_ref, g_ref, s_ref,
                 wx_ref, we_ref, wu_ref, bf_ref, feat_ref):
    feat_ref[...] = _encoder_pool(x_ref, e_ref, u_ref, g_ref, s_ref,
                                  wx_ref, we_ref, wu_ref, bf_ref)


def _out_kernel(x_ref, e_ref, u_ref, g_ref, s_ref,
                wx_ref, we_ref, wu_ref, bf_ref, wh_ref, bh_ref, out_ref):
    pooled = _encoder_pool(x_ref, e_ref, u_ref, g_ref, s_ref,
                           wx_ref, we_ref, wu_ref, bf_ref)
    out_ref[...] = jnp.dot(pooled, wh_ref[...],
                           preferred_element_type=jnp.float32) + bh_ref[...]


def _both_kernel(x_ref, e_ref, u_ref, g_ref, s_ref,
                 wx_ref, we_ref, wu_ref, bf_ref, wh_ref, bh_ref, out_ref, feat_ref):
    pooled = _encoder_pool(x_ref, e_ref, u_ref, g_ref, s_ref,
                           wx_ref, we_ref, wu_ref, bf_ref)
    feat_ref[...] = pooled
    out_ref[...] = jnp.dot(pooled, wh_ref[...],
                           preferred_element_type=jnp.float32) + bh_ref[...]


# --------------------------------------------------------------------------------------
# Wrapper
# --------------------------------------------------------------------------------------
def localmodel_forward(e, u, g, length, x, params, feat=False, *,
                       block_b=16, use_bf16=True):
    """Pallas implementation of Localmodel.forward(e, u, g, length, x, feat).

    feat=False -> head output (B, C); feat=True -> pooled features (B, H);
    feat="both" -> (out, feat) from a single pallas_call.
    """
    B, N, Dx = x.shape
    De = e.shape[-1]
    Du = u.shape[-1]
    H = params["wx"].shape[-1]
    C = params["wh"].shape[-1]

    TB = block_b                       # must be a multiple of 8
    Bp = pl.cdiv(B, TB) * TB
    pad = Bp - B

    # Lane-dense padded widths (unmasked vregs/stores on the H and C axes).
    Hp = pl.cdiv(H, 128) * 128
    Cp = pl.cdiv(C, 128) * 128

    act_dtype = jnp.bfloat16 if use_bf16 else jnp.float32

    # Activations streamed directly (no wrapper-side broadcast/concat of [x|e|u]).
    x_flat = x.reshape(B * N, Dx).astype(act_dtype)
    e_flat = e.reshape(B * N, De).astype(act_dtype)
    u_in = u.astype(act_dtype)
    g_in = g.reshape(B, N).astype(act_dtype)

    # Precompute length mask / denom as a tiny (B, N) f32 scale (no int block / divide in-kernel).
    length_i = length.astype(jnp.int32)
    mask = (jnp.arange(N, dtype=jnp.int32)[None, :] < length_i[:, None]).astype(jnp.float32)
    inv_denom = 1.0 / jnp.maximum(length_i.astype(jnp.float32), 1.0)
    scale = mask * inv_denom[:, None]                                           # (B, N)

    if pad:  # padded tail rows: scale=0 -> pooled=0; sliced away below.
        x_flat = jnp.pad(x_flat, ((0, pad * N), (0, 0)))
        e_flat = jnp.pad(e_flat, ((0, pad * N), (0, 0)))
        u_in = jnp.pad(u_in, ((0, pad), (0, 0)))
        g_in = jnp.pad(g_in, ((0, pad), (0, 0)))
        scale = jnp.pad(scale, ((0, pad), (0, 0)))

    # Encoder weights: pad H -> Hp (zero columns), cast to bf16 if requested. Bias stays f32
    # (added post-dot in f32). Head weights stay f32 (tiny, K=Hp).
    wx_p = jnp.pad(params["wx"], ((0, 0), (0, Hp - H))).astype(act_dtype)
    we_p = jnp.pad(params["we"], ((0, 0), (0, Hp - H))).astype(act_dtype)
    wu_p = jnp.pad(params["wu"], ((0, 0), (0, Hp - H))).astype(act_dtype)
    bf_p = jnp.pad(params["bf"], ((0, 0), (0, Hp - H))).astype(jnp.float32)
    wh_p = jnp.pad(params["wh"], ((0, Hp - H), (0, Cp - C))).astype(jnp.float32)
    bh_p = jnp.pad(params["bh"], ((0, 0), (0, Cp - C))).astype(jnp.float32)

    grid = (Bp // TB,)
    enc_specs = [
        pl.BlockSpec((TB * N, Dx), lambda i: (i, 0)),   # x rows
        pl.BlockSpec((TB * N, De), lambda i: (i, 0)),   # e rows
        pl.BlockSpec((TB, Du), lambda i: (i, 0)),       # u (per item)
        pl.BlockSpec((TB, N), lambda i: (i, 0)),        # gate g
        pl.BlockSpec((TB, N), lambda i: (i, 0)),        # mask/denom scale
        pl.BlockSpec((Dx, Hp), lambda i: (0, 0)),       # Wx (resident)
        pl.BlockSpec((De, Hp), lambda i: (0, 0)),       # We (resident)
        pl.BlockSpec((Du, Hp), lambda i: (0, 0)),       # Wu (resident)
        pl.BlockSpec((1, Hp), lambda i: (0, 0)),        # encoder bias
    ]
    head_specs = [
        pl.BlockSpec((Hp, Cp), lambda i: (0, 0)),       # head weight (padded, resident)
        pl.BlockSpec((1, Cp), lambda i: (0, 0)),        # head bias (padded)
    ]
    cparams = pltpu.CompilerParams(dimension_semantics=("parallel",))

    enc_args = (x_flat, e_flat, u_in, g_in, scale, wx_p, we_p, wu_p, bf_p)

    if feat is True:
        feats = pl.pallas_call(
            _feat_kernel,
            grid=grid,
            in_specs=enc_specs,
            out_specs=pl.BlockSpec((TB, Hp), lambda i: (i, 0)),
            out_shape=jax.ShapeDtypeStruct((Bp, Hp), jnp.float32),
            compiler_params=cparams,
        )(*enc_args)
        return feats[:B, :H]

    if feat == "both":
        out, feats = pl.pallas_call(
            _both_kernel,
            grid=grid,
            in_specs=enc_specs + head_specs,
            out_specs=[pl.BlockSpec((TB, Cp), lambda i: (i, 0)),
                       pl.BlockSpec((TB, Hp), lambda i: (i, 0))],
            out_shape=(jax.ShapeDtypeStruct((Bp, Cp), jnp.float32),
                       jax.ShapeDtypeStruct((Bp, Hp), jnp.float32)),
            compiler_params=cparams,
        )(*enc_args, wh_p, bh_p)
        return out[:B, :C], feats[:B, :H]

    out = pl.pallas_call(
        _out_kernel,
        grid=grid,
        in_specs=enc_specs + head_specs,
        out_specs=pl.BlockSpec((TB, Cp), lambda i: (i, 0)),
        out_shape=jax.ShapeDtypeStruct((Bp, Cp), jnp.float32),
        compiler_params=cparams,
    )(*enc_args, wh_p, bh_p)
    return out[:B, :C]


# --------------------------------------------------------------------------------------
# Plain-JAX reference (same semantics, f32)
# --------------------------------------------------------------------------------------
def reference_forward(e, u, g, length, x, params, feat=False):
    h = (x @ params["wx"] + e @ params["we"]
         + (u @ params["wu"])[:, None, :] + params["bf"][None])
    h = jnp.maximum(h, 0.0) * jax.nn.sigmoid(g)[..., None]
    N = x.shape[1]
    mask = (jnp.arange(N)[None, :] < length[:, None]).astype(jnp.float32)
    denom = jnp.maximum(length.astype(jnp.float32), 1.0)[:, None]
    pooled = jnp.sum(h * mask[..., None], axis=1) / denom
    if feat:
        return pooled
    return pooled @ params["wh"] + params["bh"]


if __name__ == "__main__":
    # B=32, TB=16 -> 2 grid steps (keeps v7x's two TensorCores fed); M = TB*N = 256.
    B, N, Dx, De, Du, H, C = 32, 16, 32, 16, 8, 32, 8

    key = jax.random.PRNGKey(0)
    ks = jax.random.split(key, 11)
    x = jax.random.normal(ks[0], (B, N, Dx), jnp.float32)
    e = jax.random.normal(ks[1], (B, N, De), jnp.float32)
    u = jax.random.normal(ks[2], (B, Du), jnp.float32)
    g = jax.random.normal(ks[3], (B, N), jnp.float32)
    length = jax.random.randint(ks[10], (B,), 1, N + 1, dtype=jnp.int32)

    params = {
        "wx": jax.random.normal(ks[4], (Dx, H), jnp.float32) * 0.1,
        "we": jax.random.normal(ks[5], (De, H), jnp.float32) * 0.1,
        "wu": jax.random.normal(ks[6], (Du, H), jnp.float32) * 0.1,
        "bf": jax.random.normal(ks[7], (1, H), jnp.float32) * 0.1,
        "wh": jax.random.normal(ks[8], (H, C), jnp.float32) * 0.1,
        "bh": jax.random.normal(ks[9], (1, C), jnp.float32) * 0.1,
    }

    out_ref = reference_forward(e, u, g, length, x, params, feat=False)
    feat_ref = reference_forward(e, u, g, length, x, params, feat=True)

    # Default (bf16 operands, f32 accumulation): loose tolerance vs. f32 reference.
    out = jax.block_until_ready(localmodel_forward(e, u, g, length, x, params, feat=False))
    feats = jax.block_until_ready(localmodel_forward(e, u, g, length, x, params, feat=True))
    both = jax.block_until_ready(localmodel_forward(e, u, g, length, x, params, feat="both"))
    assert out.shape == (B, C) and feats.shape == (B, H)
    assert jnp.allclose(out, out_ref, atol=5e-2, rtol=5e-2)
    assert jnp.allclose(feats, feat_ref, atol=5e-2, rtol=5e-2)
    assert jnp.allclose(both[0], out_ref, atol=5e-2, rtol=5e-2)
    assert jnp.allclose(both[1], feat_ref, atol=5e-2, rtol=5e-2)

    # Exact-semantics f32 path: tight tolerance.
    out32 = jax.block_until_ready(
        localmodel_forward(e, u, g, length, x, params, feat=False, use_bf16=False))
    feats32 = jax.block_until_ready(
        localmodel_forward(e, u, g, length, x, params, feat=True, use_bf16=False))
    assert jnp.allclose(out32, out_ref, atol=1e-4, rtol=1e-4)
    assert jnp.allclose(feats32, feat_ref, atol=1e-4, rtol=1e-4)

    print("KERNEL_OK")
</pallas_src>

<mosaic_0001>
module attributes {stable_mosaic.version = 11 : i64} {
  func.func @_out_kernel(%arg0: i32, %arg1: memref<256x32xbf16, #tpu.memory_space<vmem>>, %arg2: memref<256x16xbf16, #tpu.memory_space<vmem>>, %arg3: memref<16x8xbf16, #tpu.memory_space<vmem>>, %arg4: memref<16x16xbf16, #tpu.memory_space<vmem>>, %arg5: memref<16x16xf32, #tpu.memory_space<vmem>>, %arg6: memref<32x128xbf16, #tpu.memory_space<vmem>>, %arg7: memref<16x128xbf16, #tpu.memory_space<vmem>>, %arg8: memref<8x128xbf16, #tpu.memory_space<vmem>>, %arg9: memref<1x128xf32, #tpu.memory_space<vmem>>, %arg10: memref<128x128xf32, #tpu.memory_space<vmem>>, %arg11: memref<1x128xf32, #tpu.memory_space<vmem>>, %arg12: memref<16x128xf32, #tpu.memory_space<vmem>>) attributes {dimension_semantics = [#tpu.dimension_semantics<parallel>], iteration_bounds = array<i64: 2>, scalar_prefetch = 0 : i64, scratch_operands = 0 : i64, tpu.core_type = #tpu.core_type<tc>, window_params = [{transform_indices = @transform_0, window_bounds = array<i64: 256, 32>}, {transform_indices = @transform_1, window_bounds = array<i64: 256, 16>}, {transform_indices = @transform_2, window_bounds = array<i64: 16, 8>}, {transform_indices = @transform_3, window_bounds = array<i64: 16, 16>}, {transform_indices = @transform_4, window_bounds = array<i64: 16, 16>}, {pipeline_mode = #tpu.pipeline_mode<synchronous>, transform_indices = @transform_5, window_bounds = array<i64: 32, 128>}, {pipeline_mode = #tpu.pipeline_mode<synchronous>, transform_indices = @transform_6, window_bounds = array<i64: 16, 128>}, {pipeline_mode = #tpu.pipeline_mode<synchronous>, transform_indices = @transform_7, window_bounds = array<i64: 8, 128>}, {pipeline_mode = #tpu.pipeline_mode<synchronous>, transform_indices = @transform_8, window_bounds = array<i64: 1, 128>}, {pipeline_mode = #tpu.pipeline_mode<synchronous>, transform_indices = @transform_9, window_bounds = array<i64: 128, 128>}, {pipeline_mode = #tpu.pipeline_mode<synchronous>, transform_indices = @transform_10, window_bounds = array<i64: 1, 128>}, {transform_indices = @transform_11, window_bounds = array<i64: 16, 128>}]} {
    %c0 = arith.constant 0 : index
    %c0_0 = arith.constant 0 : index
    %0 = vector.load %arg1[%c0, %c0_0] : memref<256x32xbf16, #tpu.memory_space<vmem>>, vector<256x32xbf16>
    %c0_1 = arith.constant 0 : index
    %c0_2 = arith.constant 0 : index
    %1 = vector.load %arg6[%c0_1, %c0_2] : memref<32x128xbf16, #tpu.memory_space<vmem>>, vector<32x128xbf16>
    %cst = arith.constant dense<0.000000e+00> : vector<256x128xf32>
    %2 = tpu.matmul %0, %1, %cst {dimension_numbers = #tpu.dot_dimension_numbers<[1], [0], [0], [1], [0, 0, 1, 1], [], []>} : vector<256x32xbf16>, vector<32x128xbf16>, vector<256x128xf32> -> vector<256x128xf32>
    %c0_3 = arith.constant 0 : index
    %c0_4 = arith.constant 0 : index
    %3 = vector.load %arg2[%c0_3, %c0_4] : memref<256x16xbf16, #tpu.memory_space<vmem>>, vector<256x16xbf16>
    %c0_5 = arith.constant 0 : index
    %c0_6 = arith.constant 0 : index
    %4 = vector.load %arg7[%c0_5, %c0_6] : memref<16x128xbf16, #tpu.memory_space<vmem>>, vector<16x128xbf16>
    %cst_7 = arith.constant dense<0.000000e+00> : vector<256x128xf32>
    %5 = tpu.matmul %3, %4, %cst_7 {dimension_numbers = #tpu.dot_dimension_numbers<[1], [0], [0], [1], [0, 0, 1, 1], [], []>} : vector<256x16xbf16>, vector<16x128xbf16>, vector<256x128xf32> -> vector<256x128xf32>
    %6 = arith.addf %2, %5 : vector<256x128xf32>
    %c0_8 = arith.constant 0 : index
    %c0_9 = arith.constant 0 : index
    %7 = vector.load %arg3[%c0_8, %c0_9] : memref<16x8xbf16, #tpu.memory_space<vmem>>, vector<16x8xbf16>
    %c0_10 = arith.constant 0 : index
    %c0_11 = arith.constant 0 : index
    %8 = vector.load %arg8[%c0_10, %c0_11] : memref<8x128xbf16, #tpu.memory_space<vmem>>, vector<8x128xbf16>
    %cst_12 = arith.constant dense<0.000000e+00> : vector<16x128xf32>
    %9 = tpu.matmul %7, %8, %cst_12 {dimension_numbers = #tpu.dot_dimension_numbers<[1], [0], [0], [1], [0, 0, 1, 1], [], []>} : vector<16x8xbf16>, vector<8x128xbf16>, vector<16x128xf32> -> vector<16x128xf32>
    %10 = vector.shape_cast %6 : vector<256x128xf32> to vector<16x16x128xf32>
    %11 = vector.shape_cast %9 : vector<16x128xf32> to vector<16x1x128xf32>
    %12 = vector.broadcast %11 : vector<16x1x128xf32> to vector<16x16x128xf32>
    %13 = arith.addf %10, %12 : vector<16x16x128xf32>
    %c0_13 = arith.constant 0 : index
    %c0_14 = arith.constant 0 : index
    %14 = vector.load %arg9[%c0_13, %c0_14] : memref<1x128xf32, #tpu.memory_space<vmem>>, vector<1x128xf32>
    %15 = vector.shape_cast %14 : vector<1x128xf32> to vector<1x1x128xf32>
    %16 = vector.broadcast %15 : vector<1x1x128xf32> to vector<16x16x128xf32>
    %17 = arith.addf %13, %16 : vector<16x16x128xf32>
    %cst_15 = arith.constant 0.000000e+00 : f32
    %18 = vector.broadcast %cst_15 : f32 to vector<16x16x128xf32>
    %19 = arith.maximumf %17, %18 : vector<16x16x128xf32>
    %c0_16 = arith.constant 0 : index
    %c0_17 = arith.constant 0 : index
    %20 = vector.load %arg4[%c0_16, %c0_17] : memref<16x16xbf16, #tpu.memory_space<vmem>>, vector<16x16xbf16>
    %21 = arith.extf %20 : vector<16x16xbf16> to vector<16x16xf32>
    %22 = arith.negf %21 : vector<16x16xf32>
    %23 = math.exp %22 : vector<16x16xf32>
    %cst_18 = arith.constant 1.000000e+00 : f32
    %24 = vector.broadcast %cst_18 : f32 to vector<16x16xf32>
    %25 = arith.addf %24, %23 : vector<16x16xf32>
    %26 = arith.divf %24, %25 : vector<16x16xf32>
    %c0_19 = arith.constant 0 : index
    %c0_20 = arith.constant 0 : index
    %27 = vector.load %arg5[%c0_19, %c0_20] : memref<16x16xf32, #tpu.memory_space<vmem>>, vector<16x16xf32>
    %28 = arith.mulf %26, %27 : vector<16x16xf32>
    %29 = vector.shape_cast %28 : vector<16x16xf32> to vector<16x16x1xf32>
    %30 = vector.broadcast %29 : vector<16x16x1xf32> to vector<16x16x128xf32>
    %31 = arith.mulf %19, %30 : vector<16x16x128xf32>
    %cst_21 = arith.constant dense<0.000000e+00> : vector<16x128xf32>
    %32 = vector.multi_reduction <add>, %31, %cst_21 [1] : vector<16x16x128xf32> to vector<16x128xf32>
    %c0_22 = arith.constant 0 : index
    %c0_23 = arith.constant 0 : index
    %33 = vector.load %arg10[%c0_22, %c0_23] : memref<128x128xf32, #tpu.memory_space<vmem>>, vector<128x128xf32>
    %cst_24 = arith.constant dense<0.000000e+00> : vector<16x128xf32>
    %34 = tpu.matmul %32, %33, %cst_24 {dimension_numbers = #tpu.dot_dimension_numbers<[1], [0], [0], [1], [0, 0, 1, 1], [], []>} : vector<16x128xf32>, vector<128x128xf32>, vector<16x128xf32> -> vector<16x128xf32>
    %c0_25 = arith.constant 0 : index
    %c0_26 = arith.constant 0 : index
    %35 = vector.load %arg11[%c0_25, %c0_26] : memref<1x128xf32, #tpu.memory_space<vmem>>, vector<1x128xf32>
    %36 = vector.broadcast %35 : vector<1x128xf32> to vector<16x128xf32>
    %37 = arith.addf %34, %36 : vector<16x128xf32>
    %c0_27 = arith.constant 0 : index
    %c0_28 = arith.constant 0 : index
    %38 = vector.load %arg12[%c0_27, %c0_28] : memref<16x128xf32, #tpu.memory_space<vmem>>, vector<16x128xf32>
    tpu.vector_store %arg12[%c0_27, %c0_28], %37 {strides = array<i32>} : memref<16x128xf32, #tpu.memory_space<vmem>>, vector<16x128xf32>,
    return
  }
  func.func @transform_0(%arg0: i32) -> (i32, i32) {
    %c0_i32 = arith.constant 0 : i32
    %c0_i32_0 = arith.constant 0 : i32
    return %arg0, %c0_i32 : i32, i32
  }
  func.func @transform_1(%arg0: i32) -> (i32, i32) {
    %c0_i32 = arith.constant 0 : i32
    %c0_i32_0 = arith.constant 0 : i32
    return %arg0, %c0_i32 : i32, i32
  }
  func.func @transform_2(%arg0: i32) -> (i32, i32) {
    %c0_i32 = arith.constant 0 : i32
    %c0_i32_0 = arith.constant 0 : i32
    return %arg0, %c0_i32 : i32, i32
  }
  func.func @transform_3(%arg0: i32) -> (i32, i32) {
    %c0_i32 = arith.constant 0 : i32
    %c0_i32_0 = arith.constant 0 : i32
    return %arg0, %c0_i32 : i32, i32
  }
  func.func @transform_4(%arg0: i32) -> (i32, i32) {
    %c0_i32 = arith.constant 0 : i32
    %c0_i32_0 = arith.constant 0 : i32
    return %arg0, %c0_i32 : i32, i32
  }
  func.func @transform_5(%arg0: i32) -> (i32, i32) {
    %c0_i32 = arith.constant 0 : i32
    %c0_i32_0 = arith.constant 0 : i32
    %c0_i32_1 = arith.constant 0 : i32
    return %c0_i32, %c0_i32_0 : i32, i32
  }
  func.func @transform_6(%arg0: i32) -> (i32, i32) {
    %c0_i32 = arith.constant 0 : i32
    %c0_i32_0 = arith.constant 0 : i32
    %c0_i32_1 = arith.constant 0 : i32
    return %c0_i32, %c0_i32_0 : i32, i32
  }
  func.func @transform_7(%arg0: i32) -> (i32, i32) {
    %c0_i32 = arith.constant 0 : i32
    %c0_i32_0 = arith.constant 0 : i32
    %c0_i32_1 = arith.constant 0 : i32
    return %c0_i32, %c0_i32_0 : i32, i32
  }
  func.func @transform_8(%arg0: i32) -> (i32, i32) {
    %c0_i32 = arith.constant 0 : i32
    %c0_i32_0 = arith.constant 0 : i32
    %c0_i32_1 = arith.constant 0 : i32
    return %c0_i32, %c0_i32_0 : i32, i32
  }
  func.func @transform_9(%arg0: i32) -> (i32, i32) {
    %c0_i32 = arith.constant 0 : i32
    %c0_i32_0 = arith.constant 0 : i32
    %c0_i32_1 = arith.constant 0 : i32
    return %c0_i32, %c0_i32_0 : i32, i32
  }
  func.func @transform_10(%arg0: i32) -> (i32, i32) {
    %c0_i32 = arith.constant 0 : i32
    %c0_i32_0 = arith.constant 0 : i32
    %c0_i32_1 = arith.constant 0 : i32
    return %c0_i32, %c0_i32_0 : i32, i32
  }
  func.func @transform_11(%arg0: i32) -> (i32, i32) {
    %c0_i32 = arith.constant 0 : i32
    %c0_i32_0 = arith.constant 0 : i32
    return %arg0, %c0_i32 : i32, i32
  }
}

</mosaic_0001>

<llo_original>
// kernel: tpu_custom_call.1
$region0: #{tpu_custom_call.1}
  #allocation0 [shape = 'u32[]', space=smem, size = 0x4, offset = 0x4, fixed_abs, tag = 'smem constant byte address 0x4 - core index']
  #allocation1 [shape = 'u32[144,128]{1,0:T(1,128)}', space=vmem, size = 0x12000, scoped, tag = 'internal scratch']
  %s0 = inlined_call_operand.vmem [shape: bf16[512,32], index: 0, kind: input, shape index: {}]
  %s1 = inlined_call_operand.vmem [shape: bf16[512,16], index: 1, kind: input, shape index: {}]
  %s2 = inlined_call_operand.vmem [shape: bf16[32,8], index: 2, kind: input, shape index: {}]
  %s3 = inlined_call_operand.vmem [shape: bf16[32,16], index: 3, kind: input, shape index: {}]
  %s4 = inlined_call_operand.vmem [shape: f32[32,16], index: 4, kind: input, shape index: {}]
  %s5 = inlined_call_operand.vmem [shape: bf16[32,128], index: 5, kind: input, shape index: {}]
  %s6 = inlined_call_operand.vmem [shape: bf16[16,128], index: 6, kind: input, shape index: {}]
  %s7 = inlined_call_operand.vmem [shape: bf16[8,128], index: 7, kind: input, shape index: {}]
  %s8 = inlined_call_operand.vmem [shape: f32[1,128], index: 8, kind: input, shape index: {}]
  %s9 = inlined_call_operand.vmem [shape: f32[128,128], index: 9, kind: input, shape index: {}]
  %s10 = inlined_call_operand.vmem [shape: f32[1,128], index: 10, kind: input, shape index: {}]
  %s11 = inlined_call_operand.hbm [shape: f32[32,128], index: 11, kind: output, shape index: {}]
  %s12 = sld [smem:[#allocation0]]
  $region77: #{tpu_custom_call.1} parent=0
    _
  %s14 = ssub.s32 1, %s12
  %s15 = scalar_select 0, %s14, %s12
  $region1: #{tpu_custom_call.1} parent=0
    #allocation2 [shape = 'u8[16384]{0}', space=vmem, size = 0x4000, scoped, tag = 'output window, operand 0']
    #allocation3 [shape = 's32[2]{0}', space=sflag, size = 0x8, scoped, tag = 'scoped memory for tpu_custom_call.1']
    %16 = vsyncpa [#allocation3], 0
    %s17 = scalar_lea.sflag [#allocation3], 1
    %18 = vsyncpa %s17, 0
    loop: start=0, step=1, limit=4
    $region2: #{tpu_custom_call.1} parent=1 // loop_pre_header
      _
    $region3: #{tpu_custom_call.1} parent=1 // loop_header
      %s20 = sphi 0, %s24
      %p21 = scmp.ge.s32.totalorder %s20, 4
      %s30 = sphi 0, %s32
      %s33 = sphi 0, %s30
      %s34 = sphi 0, %s33
      %s50 = sphi 0, %s34
      %s56 = sphi 0, %s58
      %s59 = sphi 0, %s56
      %s60 = sphi 0, %s59
      %s76 = sphi 0, %s60
      %s82 = sphi 0, %s84
      %s85 = sphi 0, %s82
      %s86 = sphi 0, %s85
      %s102 = sphi 0, %s86
      %s108 = sphi 0, %s110
      %s111 = sphi 0, %s108
      %s112 = sphi 0, %s111
      %s128 = sphi 0, %s112
      %s134 = sphi 0, %s136
      %s137 = sphi 0, %s134
      %s138 = sphi 0, %s137
      %s154 = sphi 0, %s138
      %s158 = sphi 0, %s158
      %s160 = sphi 0, %s158
      %s161 = sphi 0, %s160
      %s175 = sphi 0, %s161
      %s179 = sphi 0, %s179
      %s181 = sphi 0, %s179
      %s182 = sphi 0, %s181
      %s196 = sphi 0, %s182
      %s200 = sphi 0, %s200
      %s202 = sphi 0, %s200
      %s203 = sphi 0, %s202
      %s217 = sphi 0, %s203
      %s221 = sphi 0, %s221
      %s223 = sphi 0, %s221
      %s224 = sphi 0, %s223
      %s238 = sphi 0, %s224
      %s242 = sphi 0, %s242
      %s244 = sphi 0, %s242
      %s245 = sphi 0, %s244
      %s259 = sphi 0, %s245
      %s263 = sphi 0, %s263
      %s265 = sphi 0, %s263
      %s266 = sphi 0, %s265
      %s280 = sphi 0, %s266
      %s286 = sphi 0, %s288
      %s289 = sphi 0, %s286
      %s290 = sphi 0, %s289
      %s306 = sphi 0, %s290
    $region4: #{tpu_custom_call.1} parent=1 // loop_header_branch
      %23 = sbr.rel (%p21) target = $region8
    $region5: #{tpu_custom_call.1} parent=1 // loop_body
      %s25 = ssub.s32 %s20, 1
      %s26 = ssub.s32 %s20, 2
      %s27 = sadd.s32 %s20, 1
      %s28 = ssub.s32 %s20, %s27
      %p29 = scmp.eq.s32.totalorder %s28, 0
      %s31 = sadd.s32 %s30, 1
      %s32 = scalar_select %p29, %s30, %s31
      %p35 = pneg %p29
      %p36 = scmp.eq.s32.totalorder %s20, 1
      %p37 = por %p35, %p36
      %p38 = scmp.ne.s32.totalorder %s30, %s33
      %p39 = scmp.eq.s32.totalorder %s20, 0
      %p40 = por %p38, %p39
      %p41 = scmp.ne.s32.totalorder %s30, %s33
      %p42 = scmp.eq.s32.totalorder %s25, 1
      %p43 = por %p41, %p42
      %p44 = scmp.ne.s32.totalorder %s33, %s34
      %p45 = scmp.eq.s32.totalorder %s25, 0
      %p46 = por %p44, %p45
      %p47 = scmp.ne.s32.totalorder %s33, %s34
      %p48 = scmp.eq.s32.totalorder %s26, 1
      %p49 = por %p47, %p48
      %p51 = scmp.ne.s32.totalorder %s34, %s50
      %p52 = scmp.eq.s32.totalorder %s26, 0
      %p53 = por %p51, %p52
      %s54 = ssub.s32 %s20, %s27
      %p55 = scmp.eq.s32.totalorder %s54, 0
      %s57 = sadd.s32 %s56, 1
      %s58 = scalar_select %p55, %s56, %s57
      %p61 = pneg %p55
      %p62 = scmp.eq.s32.totalorder %s20, 1
      %p63 = por %p61, %p62
      %p64 = scmp.ne.s32.totalorder %s56, %s59
      %p65 = scmp.eq.s32.totalorder %s20, 0
      %p66 = por %p64, %p65
      %p67 = scmp.ne.s32.totalorder %s56, %s59
      %p68 = scmp.eq.s32.totalorder %s25, 1
      %p69 = por %p67, %p68
      %p70 = scmp.ne.s32.totalorder %s59, %s60
      %p71 = scmp.eq.s32.totalorder %s25, 0
      %p72 = por %p70, %p71
      %p73 = scmp.ne.s32.totalorder %s59, %s60
      %p74 = scmp.eq.s32.totalorder %s26, 1
      %p75 = por %p73, %p74
      %p77 = scmp.ne.s32.totalorder %s60, %s76
      %p78 = scmp.eq.s32.totalorder %s26, 0
      %p79 = por %p77, %p78
      %s80 = ssub.s32 %s20, %s27
      %p81 = scmp.eq.s32.totalorder %s80, 0
      %s83 = sadd.s32 %s82, 1
      %s84 = scalar_select %p81, %s82, %s83
      %p87 = pneg %p81
      %p88 = scmp.eq.s32.totalorder %s20, 1
      %p89 = por %p87, %p88
      %p90 = scmp.ne.s32.totalorder %s82, %s85
      %p91 = scmp.eq.s32.totalorder %s20, 0
      %p92 = por %p90, %p91
      %p93 = scmp.ne.s32.totalorder %s82, %s85
      %p94 = scmp.eq.s32.totalorder %s25, 1
      %p95 = por %p93, %p94
      %p96 = scmp.ne.s32.totalorder %s85, %s86
      %p97 = scmp.eq.s32.totalorder %s25, 0
      %p98 = por %p96, %p97
      %p99 = scmp.ne.s32.totalorder %s85, %s86
      %p100 = scmp.eq.s32.totalorder %s26, 1
      %p101 = por %p99, %p100
      %p103 = scmp.ne.s32.totalorder %s86, %s102
      %p104 = scmp.eq.s32.totalorder %s26, 0
      %p105 = por %p103, %p104
      %s106 = ssub.s32 %s20, %s27
      %p107 = scmp.eq.s32.totalorder %s106, 0
      %s109 = sadd.s32 %s108, 1
      %s110 = scalar_select %p107, %s108, %s109
      %p113 = pneg %p107
      %p114 = scmp.eq.s32.totalorder %s20, 1
      %p115 = por %p113, %p114
      %p116 = scmp.ne.s32.totalorder %s108, %s111
      %p117 = scmp.eq.s32.totalorder %s20, 0
      %p118 = por %p116, %p117
      %p119 = scmp.ne.s32.totalorder %s108, %s111
      %p120 = scmp.eq.s32.totalorder %s25, 1
      %p121 = por %p119, %p120
      %p122 = scmp.ne.s32.totalorder %s111, %s112
      %p123 = scmp.eq.s32.totalorder %s25, 0
      %p124 = por %p122, %p123
      %p125 = scmp.ne.s32.totalorder %s111, %s112
      %p126 = scmp.eq.s32.totalorder %s26, 1
      %p127 = por %p125, %p126
      %p129 = scmp.ne.s32.totalorder %s112, %s128
      %p130 = scmp.eq.s32.totalorder %s26, 0
      %p131 = por %p129, %p130
      %s132 = ssub.s32 %s20, %s27
      %p133 = scmp.eq.s32.totalorder %s132, 0
      %s135 = sadd.s32 %s134, 1
      %s136 = scalar_select %p133, %s134, %s135
      %p139 = pneg %p133
      %p140 = scmp.eq.s32.totalorder %s20, 1
      %p141 = por %p139, %p140
      %p142 = scmp.ne.s32.totalorder %s134, %s137
      %p143 = scmp.eq.s32.totalorder %s20, 0
      %p144 = por %p142, %p143
      %p145 = scmp.ne.s32.totalorder %s134, %s137
      %p146 = scmp.eq.s32.totalorder %s25, 1
      %p147 = por %p145, %p146
      %p148 = scmp.ne.s32.totalorder %s137, %s138
      %p149 = scmp.eq.s32.totalorder %s25, 0
      %p150 = por %p148, %p149
      %p151 = scmp.ne.s32.totalorder %s137, %s138
      %p152 = scmp.eq.s32.totalorder %s26, 1
      %p153 = por %p151, %p152
      %p155 = scmp.ne.s32.totalorder %s138, %s154
      %p156 = scmp.eq.s32.totalorder %s26, 0
      %p157 = por %p155, %p156
      %s159 = sadd.s32 %s158, 1
      %p162 = scmp.eq.s32.totalorder %s20, 1
      %p163 = scmp.ne.s32.totalorder %s158, %s160
      %p164 = scmp.eq.s32.totalorder %s20, 0
      %p165 = por %p163, %p164
      %p166 = scmp.ne.s32.totalorder %s158, %s160
      %p167 = scmp.eq.s32.totalorder %s25, 1
      %p168 = por %p166, %p167
      %p169 = scmp.ne.s32.totalorder %s160, %s161
      %p170 = scmp.eq.s32.totalorder %s25, 0
      %p171 = por %p169, %p170
      %p172 = scmp.ne.s32.totalorder %s160, %s161
      %p173 = scmp.eq.s32.totalorder %s26, 1
      %p174 = por %p172, %p173
      %p176 = scmp.ne.s32.totalorder %s161, %s175
      %p177 = scmp.eq.s32.totalorder %s26, 0
      %p178 = por %p176, %p177
      %s180 = sadd.s32 %s179, 1
      %p183 = scmp.eq.s32.totalorder %s20, 1
      %p184 = scmp.ne.s32.totalorder %s179, %s181
      %p185 = scmp.eq.s32.totalorder %s20, 0
      %p186 = por %p184, %p185
      %p187 = scmp.ne.s32.totalorder %s179, %s181
      %p188 = scmp.eq.s32.totalorder %s25, 1
      %p189 = por %p187, %p188
      %p190 = scmp.ne.s32.totalorder %s181, %s182
      %p191 = scmp.eq.s32.totalorder %s25, 0
      %p192 = por %p190, %p191
      %p193 = scmp.ne.s32.totalorder %s181, %s182
      %p194 = scmp.eq.s32.totalorder %s26, 1
      %p195 = por %p193, %p194
      %p197 = scmp.ne.s32.totalorder %s182, %s196
      %p198 = scmp.eq.s32.totalorder %s26, 0
      %p199 = por %p197, %p198
      %s201 = sadd.s32 %s200, 1
      %p204 = scmp.eq.s32.totalorder %s20, 1
      %p205 = scmp.ne.s32.totalorder %s200, %s202
      %p206 = scmp.eq.s32.totalorder %s20, 0
      %p207 = por %p205, %p206
      %p208 = scmp.ne.s32.totalorder %s200, %s202
      %p209 = scmp.eq.s32.totalorder %s25, 1
      %p210 = por %p208, %p209
      %p211 = scmp.ne.s32.totalorder %s202, %s203
      %p212 = scmp.eq.s32.totalorder %s25, 0
      %p213 = por %p211, %p212
      %p214 = scmp.ne.s32.totalorder %s202, %s203
      %p215 = scmp.eq.s32.totalorder %s26, 1
      %p216 = por %p214, %p215
      %p218 = scmp.ne.s32.totalorder %s203, %s217
      %p219 = scmp.eq.s32.totalorder %s26, 0
      %p220 = por %p218, %p219
      %s222 = sadd.s32 %s221, 1
      %p225 = scmp.eq.s32.totalorder %s20, 1
      %p226 = scmp.ne.s32.totalorder %s221, %s223
      %p227 = scmp.eq.s32.totalorder %s20, 0
      %p228 = por %p226, %p227
      %p229 = scmp.ne.s32.totalorder %s221, %s223
      %p230 = scmp.eq.s32.totalorder %s25, 1
      %p231 = por %p229, %p230
      %p232 = scmp.ne.s32.totalorder %s223, %s224
      %p233 = scmp.eq.s32.totalorder %s25, 0
      %p234 = por %p232, %p233
      %p235 = scmp.ne.s32.totalorder %s223, %s224
      %p236 = scmp.eq.s32.totalorder %s26, 1
      %p237 = por %p235, %p236
      %p239 = scmp.ne.s32.totalorder %s224, %s238
      %p240 = scmp.eq.s32.totalorder %s26, 0
      %p241 = por %p239, %p240
      %s243 = sadd.s32 %s242, 1
      %p246 = scmp.eq.s32.totalorder %s20, 1
      %p247 = scmp.ne.s32.totalorder %s242, %s244
      %p248 = scmp.eq.s32.totalorder %s20, 0
      %p249 = por %p247, %p248
      %p250 = scmp.ne.s32.totalorder %s242, %s244
      %p251 = scmp.eq.s32.totalorder %s25, 1
      %p252 = por %p250, %p251
      %p253 = scmp.ne.s32.totalorder %s244, %s245
      %p254 = scmp.eq.s32.totalorder %s25, 0
      %p255 = por %p253, %p254
      %p256 = scmp.ne.s32.totalorder %s244, %s245
      %p257 = scmp.eq.s32.totalorder %s26, 1
      %p258 = por %p256, %p257
      %p260 = scmp.ne.s32.totalorder %s245, %s259
      %p261 = scmp.eq.s32.totalorder %s26, 0
      %p262 = por %p260, %p261
      %s264 = sadd.s32 %s263, 1
      %p267 = scmp.eq.s32.totalorder %s20, 1
      %p268 = scmp.ne.s32.totalorder %s263, %s265
      %p269 = scmp.eq.s32.totalorder %s20, 0
      %p270 = por %p268, %p269
      %p271 = scmp.ne.s32.totalorder %s263, %s265
      %p272 = scmp.eq.s32.totalorder %s25, 1
      %p273 = por %p271, %p272
      %p274 = scmp.ne.s32.totalorder %s265, %s266
      %p275 = scmp.eq.s32.totalorder %s25, 0
      %p276 = por %p274, %p275
      %p277 = scmp.ne.s32.totalorder %s265, %s266
      %p278 = scmp.eq.s32.totalorder %s26, 1
      %p279 = por %p277, %p278
      %p281 = scmp.ne.s32.totalorder %s266, %s280
      %p282 = scmp.eq.s32.totalorder %s26, 0
      %p283 = por %p281, %p282
      %s284 = ssub.s32 %s20, %s27
      %p285 = scmp.eq.s32.totalorder %s284, 0
      %s287 = sadd.s32 %s286, 1
      %s288 = scalar_select %p285, %s286, %s287
      %p291 = pneg %p285
      %p292 = scmp.eq.s32.totalorder %s20, 1
      %p293 = por %p291, %p292
      %p294 = scmp.ne.s32.totalorder %s286, %s289
      %p295 = scmp.eq.s32.totalorder %s20, 0
      %p296 = por %p294, %p295
      %p297 = scmp.ne.s32.totalorder %s286, %s289
      %p298 = scmp.eq.s32.totalorder %s25, 1
      %p299 = por %p297, %p298
      %p300 = scmp.ne.s32.totalorder %s289, %s290
      %p301 = scmp.eq.s32.totalorder %s25, 0
      %p302 = por %p300, %p301
      %p303 = scmp.ne.s32.totalorder %s289, %s290
      %p304 = scmp.eq.s32.totalorder %s26, 1
      %p305 = por %p303, %p304
      %p307 = scmp.ne.s32.totalorder %s290, %s306
      %p308 = scmp.eq.s32.totalorder %s26, 0
      %p309 = por %p307, %p308
      %p310 = scmp.le.s32.totalorder 1, %s20
      %p311 = scmp.lt.s32.totalorder %s20, 3
      %p312 = pnand %p310, %p311
      %p313 = pneg %p312
      // Predicated region
      $region9: #{tpu_custom_call.1} parent=5 // pred_check
        _
      $region10: #{tpu_custom_call.1} parent=5 // pred_check_branch
        %315 = sbr.rel (%p312) target = $region12
      $region11: #{tpu_custom_call.1} parent=5 // pred_region
        %s316 = ssub.s32 %s20, 1
        // Predicated region
        $region13: #{tpu_custom_call.1} parent=11 // pred_check
          %p317 = pneg %p171
        $region14: #{tpu_custom_call.1} parent=11 // pred_check_branch
          %319 = sbr.rel (%p317) target = $region16
        $region15: #{tpu_custom_call.1} parent=11 // pred_region
          _
        $region16: #{tpu_custom_call.1} parent=11 // pred_fallthru
          _
        // Predicated region
        $region17: #{tpu_custom_call.1} parent=11 // pred_check
          %p320 = pneg %p192
        $region18: #{tpu_custom_call.1} parent=11 // pred_check_branch
          %322 = sbr.rel (%p320) target = $region20
        $region19: #{tpu_custom_call.1} parent=11 // pred_region
          _
        $region20: #{tpu_custom_call.1} parent=11 // pred_fallthru
          _
        // Predicated region
        $region21: #{tpu_custom_call.1} parent=11 // pred_check
          %p323 = pneg %p213
        $region22: #{tpu_custom_call.1} parent=11 // pred_check_branch
          %325 = sbr.rel (%p323) target = $region24
        $region23: #{tpu_custom_call.1} parent=11 // pred_region
          _
        $region24: #{tpu_custom_call.1} parent=11 // pred_fallthru
          _
        // Predicated region
        $region25: #{tpu_custom_call.1} parent=11 // pred_check
          %p326 = pneg %p234
        $region26: #{tpu_custom_call.1} parent=11 // pred_check_branch
          %328 = sbr.rel (%p326) target = $region28
        $region27: #{tpu_custom_call.1} parent=11 // pred_region
          _
        $region28: #{tpu_custom_call.1} parent=11 // pred_fallthru
          _
        // Predicated region
        $region29: #{tpu_custom_call.1} parent=11 // pred_check
          %p329 = pneg %p255
        $region30: #{tpu_custom_call.1} parent=11 // pred_check_branch
          %331 = sbr.rel (%p329) target = $region32
        $region31: #{tpu_custom_call.1} parent=11 // pred_region
          _
        $region32: #{tpu_custom_call.1} parent=11 // pred_fallthru
          _
        // Predicated region
        $region33: #{tpu_custom_call.1} parent=11 // pred_check
          %p332 = pneg %p276
        $region34: #{tpu_custom_call.1} parent=11 // pred_check_branch
          %334 = sbr.rel (%p332) target = $region36
        $region35: #{tpu_custom_call.1} parent=11 // pred_region
          _
        $region36: #{tpu_custom_call.1} parent=11 // pred_fallthru
          _
      $region12: #{tpu_custom_call.1} parent=5 // pred_fallthru
        _
      %p335 = scmp.lt.s32.totalorder %s20, 2
      // Predicated region
      $region37: #{tpu_custom_call.1} parent=5 // pred_check
        %p336 = pneg %p335
      $region38: #{tpu_custom_call.1} parent=5 // pred_check_branch
        %338 = sbr.rel (%p336) target = $region40
      $region39: #{tpu_custom_call.1} parent=5 // pred_region
        // Predicated region
        $region41: #{tpu_custom_call.1} parent=39 // pred_check
          %p339 = pneg %p40
        $region42: #{tpu_custom_call.1} parent=39 // pred_check_branch
          %341 = sbr.rel (%p339) target = $region44
        $region43: #{tpu_custom_call.1} parent=39 // pred_region
          %s342 = smul.u32 32, %s20
          %p343 = scmp.lt.s32.totalorder %s342, 63
          %s344 = scalar_select %p343, %s342, 63
          %s345 = smul.addr %s344, 4
          %s346 = scalar_lea.vmem %s0, %s345
          %s347 = smul.u32 32, %s20
        $region44: #{tpu_custom_call.1} parent=39 // pred_fallthru
          _
        // Predicated region
        $region45: #{tpu_custom_call.1} parent=39 // pred_check
          %p348 = pneg %p66
        $region46: #{tpu_custom_call.1} parent=39 // pred_check_branch
          %350 = sbr.rel (%p348) target = $region48
        $region47: #{tpu_custom_call.1} parent=39 // pred_region
          %s351 = smul.u32 32, %s20
          %p352 = scmp.lt.s32.totalorder %s351, 63
          %s353 = scalar_select %p352, %s351, 63
          %s354 = smul.addr %s353, 4
          %s355 = scalar_lea.vmem %s1, %s354
          %s356 = smul.u32 32, %s20
        $region48: #{tpu_custom_call.1} parent=39 // pred_fallthru
          _
        // Predicated region
        $region49: #{tpu_custom_call.1} parent=39 // pred_check
          %p357 = pneg %p92
        $region50: #{tpu_custom_call.1} parent=39 // pred_check_branch
          %359 = sbr.rel (%p357) target = $region52
        $region51: #{tpu_custom_call.1} parent=39 // pred_region
          %s360 = smul.u32 2, %s20
          %p361 = scmp.lt.s32.totalorder %s360, 3
          %s362 = scalar_select %p361, %s360, 3
          %s363 = smul.addr %s362, 4
          %s364 = scalar_lea.vmem %s2, %s363
          %s365 = smul.u32 2, %s20
        $region52: #{tpu_custom_call.1} parent=39 // pred_fallthru
          _
        // Predicated region
        $region53: #{tpu_custom_call.1} parent=39 // pred_check
          %p366 = pneg %p118
        $region54: #{tpu_custom_call.1} parent=39 // pred_check_branch
          %368 = sbr.rel (%p366) target = $region56
        $region55: #{tpu_custom_call.1} parent=39 // pred_region
          %s369 = smul.u32 2, %s20
          %p370 = scmp.lt.s32.totalorder %s369, 3
          %s371 = scalar_select %p370, %s369, 3
          %s372 = smul.addr %s371, 4
          %s373 = scalar_lea.vmem %s3, %s372
          %s374 = smul.u32 2, %s20
        $region56: #{tpu_custom_call.1} parent=39 // pred_fallthru
          _
        // Predicated region
        $region57: #{tpu_custom_call.1} parent=39 // pred_check
          %p375 = pneg %p144
        $region58: #{tpu_custom_call.1} parent=39 // pred_check_branch
          %377 = sbr.rel (%p375) target = $region60
        $region59: #{tpu_custom_call.1} parent=39 // pred_region
          %s378 = smul.u32 2, %s20
          %p379 = scmp.lt.s32.totalorder %s378, 3
          %s380 = scalar_select %p379, %s378, 3
          %s381 = smul.addr %s380, 8
          %s382 = scalar_lea.vmem %s4, %s381
          %s383 = smul.u32 2, %s20
        $region60: #{tpu_custom_call.1} parent=39 // pred_fallthru
          _
      $region40: #{tpu_custom_call.1} parent=5 // pred_fallthru
        _
      %p384 = scmp.le.s32.totalorder 1, %s20
      %p385 = scmp.lt.s32.totalorder %s20, 3
      %p386 = pnand %p384, %p385
      %p387 = pneg %p386
      // Predicated region
      $region61: #{tpu_custom_call.1} parent=5 // pred_check
        _
      $region62: #{tpu_custom_call.1} parent=5 // pred_check_branch
        %389 = sbr.rel (%p386) target = $region64
      $region63: #{tpu_custom_call.1} parent=5 // pred_region
        %s390 = ssub.s32 %s20, 1
        %s391 = smul.u32 32, %s25
        %p392 = scmp.lt.s32.totalorder %s391, 63
        %s393 = scalar_select %p392, %s391, 63
        %s394 = smul.addr %s393, 4
        %s395 = scalar_lea.vmem %s0, %s394
        %p396 = pneg %p46
        %p397 = pneg %p43
        %s398 = smul.u32 32, %s25
        %p399 = scmp.lt.s32.totalorder %s398, 63
        %s400 = scalar_select %p399, %s398, 63
        %s401 = smul.addr %s400, 4
        %s402 = scalar_lea.vmem %s1, %s401
        %p403 = pneg %p72
        %p404 = pneg %p69
        %s405 = smul.u32 2, %s25
        %p406 = scmp.lt.s32.totalorder %s405, 3
        %s407 = scalar_select %p406, %s405, 3
        %s408 = smul.addr %s407, 4
        %s409 = scalar_lea.vmem %s2, %s408
        %p410 = pneg %p98
        %p411 = pneg %p95
        %s412 = smul.u32 2, %s25
        %p413 = scmp.lt.s32.totalorder %s412, 3
        %s414 = scalar_select %p413, %s412, 3
        %s415 = smul.addr %s414, 4
        %s416 = scalar_lea.vmem %s3, %s415
        %p417 = pneg %p124
        %p418 = pneg %p121
        %s419 = smul.u32 2, %s25
        %p420 = scmp.lt.s32.totalorder %s419, 3
        %s421 = scalar_select %p420, %s419, 3
        %s422 = smul.addr %s421, 8
        %s423 = scalar_lea.vmem %s4, %s422
        %p424 = pneg %p150
        %p425 = pneg %p147
        %p426 = pneg %p171
        %p427 = pneg %p168
        %p428 = pneg %p192
        %p429 = pneg %p189
        %p430 = pneg %p213
        %p431 = pneg %p210
        %p432 = pneg %p234
        %p433 = pneg %p231
        %p434 = pneg %p255
        %p435 = pneg %p252
        %p436 = pneg %p276
        %p437 = pneg %p273
        %p438 = pneg %p302
        %p439 = pneg %p299
        %s440 = sand.u32 %s289, 1
        %s441 = scalar_lea.sflag [#allocation3], %s440
        %s442 = sand.u32 %s289, 1
        %s443 = smul.addr %s442, 16
        %s444 = scalar_lea.vmem [#allocation2], %s443
        %s445 = smul.u32 32, %s25
        %p446 = scmp.lt.s32.totalorder %s445, 63
        %s447 = scalar_select %p446, %s445, 63
        %s448 = smul.addr %s447, 4
        %s449 = scalar_lea.vmem %s0, %s448
        %s450 = smul.u32 32, %s25
        %s451 = smul.u32 32, %s25
        %p452 = scmp.lt.s32.totalorder %s451, 63
        %s453 = scalar_select %p452, %s451, 63
        %s454 = smul.addr %s453, 4
        %s455 = scalar_lea.vmem %s1, %s454
        %s456 = smul.u32 32, %s25
        %s457 = smul.u32 2, %s25
        %p458 = scmp.lt.s32.totalorder %s457, 3
        %s459 = scalar_select %p458, %s457, 3
        %s460 = smul.addr %s459, 4
        %s461 = scalar_lea.vmem %s2, %s460
        %s462 = smul.u32 2, %s25
        %s463 = smul.u32 2, %s25
        %p464 = scmp.lt.s32.totalorder %s463, 3
        %s465 = scalar_select %p464, %s463, 3
        %s466 = smul.addr %s465, 4
        %s467 = scalar_lea.vmem %s3, %s466
        %s468 = smul.u32 2, %s25
        %s469 = smul.u32 2, %s25
        %p470 = scmp.lt.s32.totalorder %s469, 3
        %s471 = scalar_select %p470, %s469, 3
        %s472 = smul.addr %s471, 8
        %s473 = scalar_lea.vmem %s4, %s472
        %s474 = smul.u32 2, %s25
        %s475 = smul.u32 2, %s25
        %v477 = vld [vmem:[%s449] sm:$0xf]
        %v478 = vld [vmem:[%s449 + $0x4] sm:$0xf]
        %v479 = vld [vmem:[%s449 + $0x8] sm:$0xf]
        %v480 = vld [vmem:[%s449 + $0xc] sm:$0xf]
        %v481 = vld [vmem:[%s449 + $0x10] sm:$0xf]
        %v482 = vld [vmem:[%s449 + $0x14] sm:$0xf]
        %v483 = vld [vmem:[%s449 + $0x18] sm:$0xf]
        %v484 = vld [vmem:[%s449 + $0x1c] sm:$0xf]
        %v485 = vld [vmem:[%s449 + $0x20] sm:$0xf]
        %v486 = vld [vmem:[%s449 + $0x24] sm:$0xf]
        %v487 = vld [vmem:[%s449 + $0x28] sm:$0xf]
        %v488 = vld [vmem:[%s449 + $0x2c] sm:$0xf]
        %v489 = vld [vmem:[%s449 + $0x30] sm:$0xf]
        %v490 = vld [vmem:[%s449 + $0x34] sm:$0xf]
        %v491 = vld [vmem:[%s449 + $0x38] sm:$0xf]
        %v492 = vld [vmem:[%s449 + $0x3c] sm:$0xf]
        %v493 = vld [vmem:[%s449 + $0x40] sm:$0xf]
        %v494 = vld [vmem:[%s449 + $0x44] sm:$0xf]
        %v495 = vld [vmem:[%s449 + $0x48] sm:$0xf]
        %v496 = vld [vmem:[%s449 + $0x4c] sm:$0xf]
        %v497 = vld [vmem:[%s449 + $0x50] sm:$0xf]
        %v498 = vld [vmem:[%s449 + $0x54] sm:$0xf]
        %v499 = vld [vmem:[%s449 + $0x58] sm:$0xf]
        %v500 = vld [vmem:[%s449 + $0x5c] sm:$0xf]
        %v501 = vld [vmem:[%s449 + $0x60] sm:$0xf]
        %v502 = vld [vmem:[%s449 + $0x64] sm:$0xf]
        %v503 = vld [vmem:[%s449 + $0x68] sm:$0xf]
        %v504 = vld [vmem:[%s449 + $0x6c] sm:$0xf]
        %v505 = vld [vmem:[%s449 + $0x70] sm:$0xf]
        %v506 = vld [vmem:[%s449 + $0x74] sm:$0xf]
        %v507 = vld [vmem:[%s449 + $0x78] sm:$0xf]
        %v508 = vld [vmem:[%s449 + $0x7c] sm:$0xf]
        %v509 = vld [vmem:[%s5] sm:$0xf]
        %v510 = vld [vmem:[%s5 + $0x4] sm:$0xf]
        %v511 = vld [vmem:[%s5 + $0x8] sm:$0xf]
        %v512 = vld [vmem:[%s5 + $0xc] sm:$0xf]
        %v513 = vld [vmem:[%s455] sm:$0xf]
        %v514 = vld [vmem:[%s455 + $0x4] sm:$0xf]
        %v515 = vld [vmem:[%s455 + $0x8] sm:$0xf]
        %v516 = vld [vmem:[%s455 + $0xc] sm:$0xf]
        %v517 = vld [vmem:[%s455 + $0x10] sm:$0xf]
        %v518 = vld [vmem:[%s455 + $0x14] sm:$0xf]
        %v519 = vld [vmem:[%s455 + $0x18] sm:$0xf]
        %v520 = vld [vmem:[%s455 + $0x1c] sm:$0xf]
        %v521 = vld [vmem:[%s455 + $0x20] sm:$0xf]
        %v522 = vld [vmem:[%s455 + $0x24] sm:$0xf]
        %v523 = vld [vmem:[%s455 + $0x28] sm:$0xf]
        %v524 = vld [vmem:[%s455 + $0x2c] sm:$0xf]
        %v525 = vld [vmem:[%s455 + $0x30] sm:$0xf]
        %v526 = vld [vmem:[%s455 + $0x34] sm:$0xf]
        %v527 = vld [vmem:[%s455 + $0x38] sm:$0xf]
        %v528 = vld [vmem:[%s455 + $0x3c] sm:$0xf]
        %v529 = vld [vmem:[%s455 + $0x40] sm:$0xf]
        %v530 = vld [vmem:[%s455 + $0x44] sm:$0xf]
        %v531 = vld [vmem:[%s455 + $0x48] sm:$0xf]
        %v532 = vld [vmem:[%s455 + $0x4c] sm:$0xf]
        %v533 = vld [vmem:[%s455 + $0x50] sm:$0xf]
        %v534 = vld [vmem:[%s455 + $0x54] sm:$0xf]
        %v535 = vld [vmem:[%s455 + $0x58] sm:$0xf]
        %v536 = vld [vmem:[%s455 + $0x5c] sm:$0xf]
        %v537 = vld [vmem:[%s455 + $0x60] sm:$0xf]
        %v538 = vld [vmem:[%s455 + $0x64] sm:$0xf]
        %v539 = vld [vmem:[%s455 + $0x68] sm:$0xf]
        %v540 = vld [vmem:[%s455 + $0x6c] sm:$0xf]
        %v541 = vld [vmem:[%s455 + $0x70] sm:$0xf]
        %v542 = vld [vmem:[%s455 + $0x74] sm:$0xf]
        %v543 = vld [vmem:[%s455 + $0x78] sm:$0xf]
        %v544 = vld [vmem:[%s455 + $0x7c] sm:$0xf]
        %v545 = vld [vmem:[%s6] sm:$0xf]
        %v546 = vld [vmem:[%s6 + $0x4] sm:$0xf]
        %v579 = vunpack.c.l.b16 %v513
        %v580 = vunpack.c.l.b16 %v514
        %v581 = vunpack.c.l.b16 %v515
        %v582 = vunpack.c.l.b16 %v516
        %v583 = vunpack.c.l.b16 %v517
        %v584 = vunpack.c.l.b16 %v518
        %v585 = vunpack.c.l.b16 %v519
        %v586 = vunpack.c.l.b16 %v520
        %v587 = vunpack.c.l.b16 %v521
        %v588 = vunpack.c.l.b16 %v522
        %v589 = vunpack.c.l.b16 %v523
        %v590 = vunpack.c.l.b16 %v524
        %v591 = vunpack.c.l.b16 %v525
        %v592 = vunpack.c.l.b16 %v526
        %v593 = vunpack.c.l.b16 %v527
        %v594 = vunpack.c.l.b16 %v528
        %v595 = vunpack.c.l.b16 %v529
        %v596 = vunpack.c.l.b16 %v530
        %v597 = vunpack.c.l.b16 %v531
        %v598 = vunpack.c.l.b16 %v532
        %v599 = vunpack.c.l.b16 %v533
        %v600 = vunpack.c.l.b16 %v534
        %v601 = vunpack.c.l.b16 %v535
        %v602 = vunpack.c.l.b16 %v536
        %v603 = vunpack.c.l.b16 %v537
        %v604 = vunpack.c.l.b16 %v538
        %v605 = vunpack.c.l.b16 %v539
        %v606 = vunpack.c.l.b16 %v540
        %v607 = vunpack.c.l.b16 %v541
        %v608 = vunpack.c.l.b16 %v542
        %v609 = vunpack.c.l.b16 %v543
        %v610 = vunpack.c.l.b16 %v544
        %v611 = vpack.c.b16 %v580, %v579
        %v612 = vpack.c.b16 %v582, %v581
        %v613 = vpack.c.b16 %v584, %v583
        %v614 = vpack.c.b16 %v586, %v585
        %v615 = vpack.c.b16 %v588, %v587
        %v616 = vpack.c.b16 %v590, %v589
        %v617 = vpack.c.b16 %v592, %v591
        %v618 = vpack.c.b16 %v594, %v593
        %v619 = vpack.c.b16 %v596, %v595
        %v620 = vpack.c.b16 %v598, %v597
        %v621 = vpack.c.b16 %v600, %v599
        %v622 = vpack.c.b16 %v602, %v601
        %v623 = vpack.c.b16 %v604, %v603
        %v624 = vpack.c.b16 %v606, %v605
        %v625 = vpack.c.b16 %v608, %v607
        %v626 = vpack.c.b16 %v610, %v609
        %v629 = vunpack.c.l.b16 %v545
        %v630 = vunpack.c.l.b16 %v546
        %v631 = vpack.c.b16 %v630, %v629
        %vm633 = vcmask 130048
        %v635 = vsel %vm633, %v611, 0
        %v638 = vsel %vm633, %v612, 0
        %v641 = vsel %vm633, %v613, 0
        %v644 = vsel %vm633, %v614, 0
        %v647 = vsel %vm633, %v615, 0
        %v650 = vsel %vm633, %v616, 0
        %v653 = vsel %vm633, %v617, 0
        %v656 = vsel %vm633, %v618, 0
        %v659 = vsel %vm633, %v619, 0
        %v662 = vsel %vm633, %v620, 0
        %v665 = vsel %vm633, %v621, 0
        %v668 = vsel %vm633, %v622, 0
        %v671 = vsel %vm633, %v623, 0
        %v674 = vsel %vm633, %v624, 0
        %v677 = vsel %vm633, %v625, 0
        %v680 = vsel %vm633, %v626, 0
        %682 = vmatprep.subr.bf16.mxu0 0
        %683 = vmatpush1.bf16.msra.mxu0 0
        %684 = vmatprep.subr.bf16.mxu0 0
        %685 = vmatpush1.bf16.msra.mxu0 0
        %686 = vmatprep.subr.bf16.mxu0 0
        %687 = vmatpush1.bf16.msra.mxu0 0
        %688 = vmatprep.subr.bf16.mxu0 0
        %689 = vmatpush1.bf16.msra.mxu0 0
        %690 = vmatprep.subr.bf16.mxu0 0
        %691 = vmatpush1.bf16.msra.mxu0 0
        %692 = vmatprep.subr.bf16.mxu0 0
        %693 = vmatpush1.bf16.msra.mxu0 0
        %694 = vmatprep.subr.bf16.mxu0 0
        %695 = vmatpush1.bf16.msra.mxu0 0
        %696 = vmatprep.subr.bf16.mxu0 0
        %697 = vmatpush1.bf16.msra.mxu0 %v631
        %698 = vmatprep.subr.bf16.mxu0 0
        %699 = vmatpush2.bf16.msra.mxu0 0
        %700 = vmatprep.subr.bf16.mxu0 0
        %701 = vmatpush2.bf16.msra.mxu0 0
        %702 = vmatprep.subr.bf16.mxu0 0
        %703 = vmatpush2.bf16.msra.mxu0 0
        %704 = vmatprep.subr.bf16.mxu0 0
        %705 = vmatpush2.bf16.msra.mxu0 0
        %706 = vmatprep.subr.bf16.mxu0 0
        %707 = vmatpush2.bf16.msra.mxu0 0
        %708 = vmatprep.subr.bf16.mxu0 0
        %709 = vmatpush2.bf16.msra.mxu0 0
        %710 = vmatprep.subr.bf16.mxu0 0
        %711 = vmatpush2.bf16.msra.mxu0 0
        %712 = vmatprep.subr.bf16.mxu0 0
        %713 = vmatpush2.bf16.msra.mxu0 0
        %714 = vmatprep.mubr.bf16.mxu0 0
        %715 = vmatmul.mubr.bf16.gmra.mxu0 %v635
        %v716 = vpop.f32.mrf.mxu0
        %v717 = vadd.f32 0.0, %v716
        %v718 = vpop.f32.mrf.mxu0
        %v719 = vpop.f32.mrf.mxu0
        %v720 = vadd.f32 0.0, %v719
        %v721 = vpop.f32.mrf.mxu0
        %722 = vmatprep.mubr.bf16.mxu0 0
        %723 = vmatmul.mubr.bf16.gmra.mxu0 %v638
        %v724 = vpop.f32.mrf.mxu0
        %v725 = vadd.f32 0.0, %v724
        %v726 = vpop.f32.mrf.mxu0
        %v727 = vpop.f32.mrf.mxu0
        %v728 = vadd.f32 0.0, %v727
        %v729 = vpop.f32.mrf.mxu0
        %730 = vmatprep.mubr.bf16.mxu0 0
        %731 = vmatmul.mubr.bf16.gmra.mxu0 %v641
        %v732 = vpop.f32.mrf.mxu0
        %v733 = vadd.f32 0.0, %v732
        %v734 = vpop.f32.mrf.mxu0
        %v735 = vpop.f32.mrf.mxu0
        %v736 = vadd.f32 0.0, %v735
        %v737 = vpop.f32.mrf.mxu0
        %738 = vmatprep.mubr.bf16.mxu0 0
        %739 = vmatmul.mubr.bf16.gmra.mxu0 %v644
        %v740 = vpop.f32.mrf.mxu0
        %v741 = vadd.f32 0.0, %v740
        %v742 = vpop.f32.mrf.mxu0
        %v743 = vpop.f32.mrf.mxu0
        %v744 = vadd.f32 0.0, %v743
        %v745 = vpop.f32.mrf.mxu0
        %746 = vmatprep.mubr.bf16.mxu0 0
        %747 = vmatmul.mubr.bf16.gmra.mxu0 %v647
        %v748 = vpop.f32.mrf.mxu0
        %v749 = vadd.f32 0.0, %v748
        %v750 = vpop.f32.mrf.mxu0
        %v751 = vpop.f32.mrf.mxu0
        %v752 = vadd.f32 0.0, %v751
        %v753 = vpop.f32.mrf.mxu0
        %754 = vmatprep.mubr.bf16.mxu0 0
        %755 = vmatmul.mubr.bf16.gmra.mxu0 %v650
        %v756 = vpop.f32.mrf.mxu0
        %v757 = vadd.f32 0.0, %v756
        %v758 = vpop.f32.mrf.mxu0
        %v759 = vpop.f32.mrf.mxu0
        %v760 = vadd.f32 0.0, %v759
        %v761 = vpop.f32.mrf.mxu0
        %762 = vmatprep.mubr.bf16.mxu0 0
        %763 = vmatmul.mubr.bf16.gmra.mxu0 %v653
        %v764 = vpop.f32.mrf.mxu0
        %v765 = vadd.f32 0.0, %v764
        %v766 = vpop.f32.mrf.mxu0
        %v767 = vpop.f32.mrf.mxu0
        %v768 = vadd.f32 0.0, %v767
        %v769 = vpop.f32.mrf.mxu0
        %770 = vmatprep.mubr.bf16.mxu0 0
        %771 = vmatmul.mubr.bf16.gmra.mxu0 %v656
        %v772 = vpop.f32.mrf.mxu0
        %v773 = vadd.f32 0.0, %v772
        %v774 = vpop.f32.mrf.mxu0
        %v775 = vpop.f32.mrf.mxu0
        %v776 = vadd.f32 0.0, %v775
        %v777 = vpop.f32.mrf.mxu0
        %778 = vmatprep.mubr.bf16.mxu0 0
        %779 = vmatmul.mubr.bf16.gmra.mxu0 %v659
        %v780 = vpop.f32.mrf.mxu0
        %v781 = vadd.f32 0.0, %v780
        %v782 = vpop.f32.mrf.mxu0
        %v783 = vpop.f32.mrf.mxu0
        %v784 = vadd.f32 0.0, %v783
        %v785 = vpop.f32.mrf.mxu0
        %786 = vmatprep.mubr.bf16.mxu0 0
        %787 = vmatmul.mubr.bf16.gmra.mxu0 %v662
        %v788 = vpop.f32.mrf.mxu0
        %v789 = vadd.f32 0.0, %v788
        %v790 = vpop.f32.mrf.mxu0
        %v791 = vpop.f32.mrf.mxu0
        %v792 = vadd.f32 0.0, %v791
        %v793 = vpop.f32.mrf.mxu0
        %794 = vmatprep.mubr.bf16.mxu0 0
        %795 = vmatmul.mubr.bf16.gmra.mxu0 %v665
        %v796 = vpop.f32.mrf.mxu0
        %v797 = vadd.f32 0.0, %v796
        %v798 = vpop.f32.mrf.mxu0
        %v799 = vpop.f32.mrf.mxu0
        %v800 = vadd.f32 0.0, %v799
        %v801 = vpop.f32.mrf.mxu0
        %802 = vmatprep.mubr.bf16.mxu0 0
        %803 = vmatmul.mubr.bf16.gmra.mxu0 %v668
        %v804 = vpop.f32.mrf.mxu0
        %v805 = vadd.f32 0.0, %v804
        %v806 = vpop.f32.mrf.mxu0
        %v807 = vpop.f32.mrf.mxu0
        %v808 = vadd.f32 0.0, %v807
        %v809 = vpop.f32.mrf.mxu0
        %810 = vmatprep.mubr.bf16.mxu0 0
        %811 = vmatmul.mubr.bf16.gmra.mxu0 %v671
        %v812 = vpop.f32.mrf.mxu0
        %v813 = vadd.f32 0.0, %v812
        %v814 = vpop.f32.mrf.mxu0
        %v815 = vpop.f32.mrf.mxu0
        %v816 = vadd.f32 0.0, %v815
        %v817 = vpop.f32.mrf.mxu0
        %818 = vmatprep.mubr.bf16.mxu0 0
        %819 = vmatmul.mubr.bf16.gmra.mxu0 %v674
        %v820 = vpop.f32.mrf.mxu0
        %v821 = vadd.f32 0.0, %v820
        %v822 = vpop.f32.mrf.mxu0
        %v823 = vpop.f32.mrf.mxu0
        %v824 = vadd.f32 0.0, %v823
        %v825 = vpop.f32.mrf.mxu0
        %826 = vmatprep.mubr.bf16.mxu0 0
        %827 = vmatmul.mubr.bf16.gmra.mxu0 %v677
        %v828 = vpop.f32.mrf.mxu0
        %v829 = vadd.f32 0.0, %v828
        %v830 = vpop.f32.mrf.mxu0
        %v831 = vpop.f32.mrf.mxu0
        %v832 = vadd.f32 0.0, %v831
        %v833 = vpop.f32.mrf.mxu0
        %834 = vmatprep.mubr.bf16.mxu0 0
        %835 = vmatmul.mubr.bf16.gmra.mxu0 %v680
        %v836 = vpop.f32.mrf.mxu0
        %v837 = vadd.f32 0.0, %v836
        %v838 = vpop.f32.mrf.mxu0
        %v839 = vpop.f32.mrf.mxu0
        %v840 = vadd.f32 0.0, %v839
        %v841 = vpop.f32.mrf.mxu0
        %842 = vdwg.mxu0
        %v875 = vunpack.c.l.b16 %v477
        %v876 = vunpack.c.l.b16 %v478
        %v877 = vunpack.c.l.b16 %v479
        %v878 = vunpack.c.l.b16 %v480
        %v879 = vunpack.c.l.b16 %v481
        %v880 = vunpack.c.l.b16 %v482
        %v881 = vunpack.c.l.b16 %v483
        %v882 = vunpack.c.l.b16 %v484
        %v883 = vunpack.c.l.b16 %v485
        %v884 = vunpack.c.l.b16 %v486
        %v885 = vunpack.c.l.b16 %v487
        %v886 = vunpack.c.l.b16 %v488
        %v887 = vunpack.c.l.b16 %v489
        %v888 = vunpack.c.l.b16 %v490
        %v889 = vunpack.c.l.b16 %v491
        %v890 = vunpack.c.l.b16 %v492
        %v891 = vunpack.c.l.b16 %v493
        %v892 = vunpack.c.l.b16 %v494
        %v893 = vunpack.c.l.b16 %v495
        %v894 = vunpack.c.l.b16 %v496
        %v895 = vunpack.c.l.b16 %v497
        %v896 = vunpack.c.l.b16 %v498
        %v897 = vunpack.c.l.b16 %v499
        %v898 = vunpack.c.l.b16 %v500
        %v899 = vunpack.c.l.b16 %v501
        %v900 = vunpack.c.l.b16 %v502
        %v901 = vunpack.c.l.b16 %v503
        %v902 = vunpack.c.l.b16 %v504
        %v903 = vunpack.c.l.b16 %v505
        %v904 = vunpack.c.l.b16 %v506
        %v905 = vunpack.c.l.b16 %v507
        %v906 = vunpack.c.l.b16 %v508
        %v907 = vpack.c.b16 %v876, %v875
        %v908 = vpack.c.b16 %v878, %v877
        %v909 = vpack.c.b16 %v880, %v879
        %v910 = vpack.c.b16 %v882, %v881
        %v911 = vpack.c.b16 %v884, %v883
        %v912 = vpack.c.b16 %v886, %v885
        %v913 = vpack.c.b16 %v888, %v887
        %v914 = vpack.c.b16 %v890, %v889
        %v915 = vpack.c.b16 %v892, %v891
        %v916 = vpack.c.b16 %v894, %v893
        %v917 = vpack.c.b16 %v896, %v895
        %v918 = vpack.c.b16 %v898, %v897
        %v919 = vpack.c.b16 %v900, %v899
        %v920 = vpack.c.b16 %v902, %v901
        %v921 = vpack.c.b16 %v904, %v903
        %v922 = vpack.c.b16 %v906, %v905
        %v927 = vunpack.c.l.b16 %v509
        %v928 = vunpack.c.l.b16 %v510
        %v929 = vunpack.c.l.b16 %v511
        %v930 = vunpack.c.l.b16 %v512
        %v931 = vpack.c.b16 %v928, %v927
        %v932 = vpack.c.b16 %v930, %v929
        %vm935 = vcmask 261120
        %v937 = vsel %vm935, %v907, 0
        %v940 = vsel %vm935, %v908, 0
        %v943 = vsel %vm935, %v909, 0
        %v946 = vsel %vm935, %v910, 0
        %v949 = vsel %vm935, %v911, 0
        %v952 = vsel %vm935, %v912, 0
        %v955 = vsel %vm935, %v913, 0
        %v958 = vsel %vm935, %v914, 0
        %v961 = vsel %vm935, %v915, 0
        %v964 = vsel %vm935, %v916, 0
        %v967 = vsel %vm935, %v917, 0
        %v970 = vsel %vm935, %v918, 0
        %v973 = vsel %vm935, %v919, 0
        %v976 = vsel %vm935, %v920, 0
        %v979 = vsel %vm935, %v921, 0
        %v982 = vsel %vm935, %v922, 0
        %984 = vmatprep.subr.bf16.mxu0 0
        %985 = vmatpush1.bf16.msra.mxu0 0
        %986 = vmatprep.subr.bf16.mxu0 0
        %987 = vmatpush1.bf16.msra.mxu0 0
        %988 = vmatprep.subr.bf16.mxu0 0
        %989 = vmatpush1.bf16.msra.mxu0 0
        %990 = vmatprep.subr.bf16.mxu0 0
        %991 = vmatpush1.bf16.msra.mxu0 0
        %992 = vmatprep.subr.bf16.mxu0 0
        %993 = vmatpush1.bf16.msra.mxu0 0
        %994 = vmatprep.subr.bf16.mxu0 0
        %995 = vmatpush1.bf16.msra.mxu0 0
        %996 = vmatprep.subr.bf16.mxu0 0
        %997 = vmatpush1.bf16.msra.mxu0 %v932
        %998 = vmatprep.subr.bf16.mxu0 0
        %999 = vmatpush1.bf16.msra.mxu0 %v931
        %1000 = vmatprep.subr.bf16.mxu0 0
        %1001 = vmatpush2.bf16.msra.mxu0 0
        %1002 = vmatprep.subr.bf16.mxu0 0
        %1003 = vmatpush2.bf16.msra.mxu0 0
        %1004 = vmatprep.subr.bf16.mxu0 0
        %1005 = vmatpush2.bf16.msra.mxu0 0
        %1006 = vmatprep.subr.bf16.mxu0 0
        %1007 = vmatpush2.bf16.msra.mxu0 0
        %1008 = vmatprep.subr.bf16.mxu0 0
        %1009 = vmatpush2.bf16.msra.mxu0 0
        %1010 = vmatprep.subr.bf16.mxu0 0
        %1011 = vmatpush2.bf16.msra.mxu0 0
        %1012 = vmatprep.subr.bf16.mxu0 0
        %1013 = vmatpush2.bf16.msra.mxu0 0
        %1014 = vmatprep.subr.bf16.mxu0 0
        %1015 = vmatpush2.bf16.msra.mxu0 0
        %1016 = vmatprep.mubr.bf16.mxu0 0
        %1017 = vmatmul.mubr.bf16.gmra.mxu0 %v937
        %v1018 = vpop.f32.mrf.mxu0
        %v1019 = vadd.f32 %v717, %v1018
        %v1020 = vpop.f32.mrf.mxu0
        %v1021 = vpop.f32.mrf.mxu0
        %v1022 = vadd.f32 %v720, %v1021
        %v1023 = vpop.f32.mrf.mxu0
        %1024 = vmatprep.mubr.bf16.mxu0 0
        %1025 = vmatmul.mubr.bf16.gmra.mxu0 %v940
        %v1026 = vpop.f32.mrf.mxu0
        %v1027 = vadd.f32 %v725, %v1026
        %v1028 = vpop.f32.mrf.mxu0
        %v1029 = vpop.f32.mrf.mxu0
        %v1030 = vadd.f32 %v728, %v1029
        %v1031 = vpop.f32.mrf.mxu0
        %1032 = vmatprep.mubr.bf16.mxu0 0
        %1033 = vmatmul.mubr.bf16.gmra.mxu0 %v943
        %v1034 = vpop.f32.mrf.mxu0
        %v1035 = vadd.f32 %v733, %v1034
        %v1036 = vpop.f32.mrf.mxu0
        %v1037 = vpop.f32.mrf.mxu0
        %v1038 = vadd.f32 %v736, %v1037
        %v1039 = vpop.f32.mrf.mxu0
        %1040 = vmatprep.mubr.bf16.mxu0 0
        %1041 = vmatmul.mubr.bf16.gmra.mxu0 %v946
        %v1042 = vpop.f32.mrf.mxu0
        %v1043 = vadd.f32 %v741, %v1042
        %v1044 = vpop.f32.mrf.mxu0
        %v1045 = vpop.f32.mrf.mxu0
        %v1046 = vadd.f32 %v744, %v1045
        %v1047 = vpop.f32.mrf.mxu0
        %1048 = vmatprep.mubr.bf16.mxu0 0
        %1049 = vmatmul.mubr.bf16.gmra.mxu0 %v949
        %v1050 = vpop.f32.mrf.mxu0
        %v1051 = vadd.f32 %v749, %v1050
        %v1052 = vpop.f32.mrf.mxu0
        %v1053 = vpop.f32.mrf.mxu0
        %v1054 = vadd.f32 %v752, %v1053
        %v1055 = vpop.f32.mrf.mxu0
        %1056 = vmatprep.mubr.bf16.mxu0 0
        %1057 = vmatmul.mubr.bf16.gmra.mxu0 %v952
        %v1058 = vpop.f32.mrf.mxu0
        %v1059 = vadd.f32 %v757, %v1058
        %v1060 = vpop.f32.mrf.mxu0
        %v1061 = vpop.f32.mrf.mxu0
        %v1062 = vadd.f32 %v760, %v1061
        %v1063 = vpop.f32.mrf.mxu0
        %1064 = vmatprep.mubr.bf16.mxu0 0
        %1065 = vmatmul.mubr.bf16.gmra.mxu0 %v955
        %v1066 = vpop.f32.mrf.mxu0
        %v1067 = vadd.f32 %v765, %v1066
        %v1068 = vpop.f32.mrf.mxu0
        %v1069 = vpop.f32.mrf.mxu0
        %v1070 = vadd.f32 %v768, %v1069
        %v1071 = vpop.f32.mrf.mxu0
        %1072 = vmatprep.mubr.bf16.mxu0 0
        %1073 = vmatmul.mubr.bf16.gmra.mxu0 %v958
        %v1074 = vpop.f32.mrf.mxu0
        %v1075 = vadd.f32 %v773, %v1074
        %v1076 = vpop.f32.mrf.mxu0
        %v1077 = vpop.f32.mrf.mxu0
        %v1078 = vadd.f32 %v776, %v1077
        %v1079 = vpop.f32.mrf.mxu0
        %1080 = vmatprep.mubr.bf16.mxu0 0
        %1081 = vmatmul.mubr.bf16.gmra.mxu0 %v961
        %v1082 = vpop.f32.mrf.mxu0
        %v1083 = vadd.f32 %v781, %v1082
        %v1084 = vpop.f32.mrf.mxu0
        %v1085 = vpop.f32.mrf.mxu0
        %v1086 = vadd.f32 %v784, %v1085
        %v1087 = vpop.f32.mrf.mxu0
        %1088 = vmatprep.mubr.bf16.mxu0 0
        %1089 = vmatmul.mubr.bf16.gmra.mxu0 %v964
        %v1090 = vpop.f32.mrf.mxu0
        %v1091 = vadd.f32 %v789, %v1090
        %v1092 = vpop.f32.mrf.mxu0
        %v1093 = vpop.f32.mrf.mxu0
        %v1094 = vadd.f32 %v792, %v1093
        %v1095 = vpop.f32.mrf.mxu0
        %1096 = vmatprep.mubr.bf16.mxu0 0
        %1097 = vmatmul.mubr.bf16.gmra.mxu0 %v967
        %v1098 = vpop.f32.mrf.mxu0
        %v1099 = vadd.f32 %v797, %v1098
        %v1100 = vpop.f32.mrf.mxu0
        %v1101 = vpop.f32.mrf.mxu0
        %v1102 = vadd.f32 %v800, %v1101
        %v1103 = vpop.f32.mrf.mxu0
        %1104 = vmatprep.mubr.bf16.mxu0 0
        %1105 = vmatmul.mubr.bf16.gmra.mxu0 %v970
        %v1106 = vpop.f32.mrf.mxu0
        %v1107 = vadd.f32 %v805, %v1106
        %v1108 = vpop.f32.mrf.mxu0
        %v1109 = vpop.f32.mrf.mxu0
        %v1110 = vadd.f32 %v808, %v1109
        %v1111 = vpop.f32.mrf.mxu0
        %1112 = vmatprep.mubr.bf16.mxu0 0
        %1113 = vmatmul.mubr.bf16.gmra.mxu0 %v973
        %v1114 = vpop.f32.mrf.mxu0
        %v1115 = vadd.f32 %v813, %v1114
        %v1116 = vpop.f32.mrf.mxu0
        %v1117 = vpop.f32.mrf.mxu0
        %v1118 = vadd.f32 %v816, %v1117
        %v1119 = vpop.f32.mrf.mxu0
        %1120 = vmatprep.mubr.bf16.mxu0 0
        %1121 = vmatmul.mubr.bf16.gmra.mxu0 %v976
        %v1122 = vpop.f32.mrf.mxu0
        %v1123 = vadd.f32 %v821, %v1122
        %v1124 = vpop.f32.mrf.mxu0
        %v1125 = vpop.f32.mrf.mxu0
        %v1126 = vadd.f32 %v824, %v1125
        %v1127 = vpop.f32.mrf.mxu0
        %1128 = vmatprep.mubr.bf16.mxu0 0
        %1129 = vmatmul.mubr.bf16.gmra.mxu0 %v979
        %v1130 = vpop.f32.mrf.mxu0
        %v1131 = vadd.f32 %v829, %v1130
        %v1132 = vpop.f32.mrf.mxu0
        %v1133 = vpop.f32.mrf.mxu0
        %v1134 = vadd.f32 %v832, %v1133
        %v1135 = vpop.f32.mrf.mxu0
        %1136 = vmatprep.mubr.bf16.mxu0 0
        %1137 = vmatmul.mubr.bf16.gmra.mxu0 %v982
        %v1138 = vpop.f32.mrf.mxu0
        %v1139 = vadd.f32 %v837, %v1138
        %v1140 = vpop.f32.mrf.mxu0
        %v1141 = vpop.f32.mrf.mxu0
        %v1142 = vadd.f32 %v840, %v1141
        %v1143 = vpop.f32.mrf.mxu0
        %1144 = vdwg.mxu0
        %v1145 = vld [vmem:[%s461] sm:$0xf]
        %v1146 = vld [vmem:[%s461 + $0x4] sm:$0xf]
        %v1147 = vld [vmem:[%s7] sm:$0xf]
        %v1150 = vunpack.c.l.b16 %v1145
        %v1151 = vunpack.c.l.b16 %v1146
        %v1152 = vpack.c.b16 %v1151, %v1150
        %vm1153 = vcmask 64512
        %v1155 = vsel %vm1153, %v1152, 0
        %vm1157 = vcmask 1043456
        %v1159 = vsel %vm1157, %v1147, 0
        %1161 = vmatprep.subr.bf16.mxu0 0
        %1162 = vmatpush1.bf16.msra.mxu0 0
        %1163 = vmatprep.subr.bf16.mxu0 0
        %1164 = vmatpush1.bf16.msra.mxu0 0
        %1165 = vmatprep.subr.bf16.mxu0 0
        %1166 = vmatpush1.bf16.msra.mxu0 0
        %1167 = vmatprep.subr.bf16.mxu0 0
        %1168 = vmatpush1.bf16.msra.mxu0 0
        %1169 = vmatprep.subr.bf16.mxu0 0
        %1170 = vmatpush1.bf16.msra.mxu0 0
        %1171 = vmatprep.subr.bf16.mxu0 0
        %1172 = vmatpush1.bf16.msra.mxu0 0
        %1173 = vmatprep.subr.bf16.mxu0 0
        %1174 = vmatpush1.bf16.msra.mxu0 0
        %1175 = vmatprep.subr.bf16.mxu0 0
        %1176 = vmatpush1.bf16.msra.mxu0 %v1159
        %1177 = vmatprep.subr.bf16.mxu0 0
        %1178 = vmatpush2.bf16.msra.mxu0 0
        %1179 = vmatprep.subr.bf16.mxu0 0
        %1180 = vmatpush2.bf16.msra.mxu0 0
        %1181 = vmatprep.subr.bf16.mxu0 0
        %1182 = vmatpush2.bf16.msra.mxu0 0
        %1183 = vmatprep.subr.bf16.mxu0 0
        %1184 = vmatpush2.bf16.msra.mxu0 0
        %1185 = vmatprep.subr.bf16.mxu0 0
        %1186 = vmatpush2.bf16.msra.mxu0 0
        %1187 = vmatprep.subr.bf16.mxu0 0
        %1188 = vmatpush2.bf16.msra.mxu0 0
        %1189 = vmatprep.subr.bf16.mxu0 0
        %1190 = vmatpush2.bf16.msra.mxu0 0
        %1191 = vmatprep.subr.bf16.mxu0 0
        %1192 = vmatpush2.bf16.msra.mxu0 0
        %1193 = vmatprep.mubr.bf16.mxu0 0
        %1194 = vmatmul.mubr.bf16.gmra.mxu0 %v1155
        %v1195 = vpop.f32.mrf.mxu0
        %v1196 = vadd.f32 0.0, %v1195
        %v1197 = vpop.f32.mrf.mxu0
        %v1198 = vpop.f32.mrf.mxu0
        %v1199 = vadd.f32 0.0, %v1198
        %v1200 = vpop.f32.mrf.mxu0
        %1201 = vdwg.mxu0
        %v1204 = vcombine.high %v1196, %v1196
        %v1206 = vunpack.c.l.s4 1966171168
        %v1207 = vunpack.c.0.s8 %v1206
        %v1208 = vlaneseq
        %v1209 = vshrl.u32 %v1208, 7
        %v1210 = vsub.s32 %v1207, %v1209
        %v1211 = vrot.slane %v1196, %v1210
        %v1213 = vunpack.c.l.s4 1966171168
        %v1214 = vunpack.c.0.s8 %v1213
        %v1215 = vlaneseq
        %v1216 = vshrl.u32 %v1215, 7
        %v1217 = vsub.s32 %v1214, %v1216
        %v1218 = vrot.slane %v1204, %v1217
        %v1219 = vcombine.high %v1211, %v1211
        %v1220 = vcombine.high %v1218, %v1218
        %v1222 = vunpack.c.l.s4 1966171168
        %v1223 = vunpack.c.0.s8 %v1222
        %v1224 = vlaneseq
        %v1225 = vshrl.u32 %v1224, 7
        %v1226 = vsub.s32 %v1223, %v1225
        %v1227 = vrot.slane %v1211, %v1226
        %v1229 = vunpack.c.l.s4 1966171168
        %v1230 = vunpack.c.0.s8 %v1229
        %v1231 = vlaneseq
        %v1232 = vshrl.u32 %v1231, 7
        %v1233 = vsub.s32 %v1230, %v1232
        %v1234 = vrot.slane %v1218, %v1233
        %v1236 = vunpack.c.l.s4 1966171168
        %v1237 = vunpack.c.0.s8 %v1236
        %v1238 = vlaneseq
        %v1239 = vshrl.u32 %v1238, 7
        %v1240 = vsub.s32 %v1237, %v1239
        %v1241 = vrot.slane %v1219, %v1240
        %v1243 = vunpack.c.l.s4 1966171168
        %v1244 = vunpack.c.0.s8 %v1243
        %v1245 = vlaneseq
        %v1246 = vshrl.u32 %v1245, 7
        %v1247 = vsub.s32 %v1244, %v1246
        %v1248 = vrot.slane %v1220, %v1247
        %v1249 = vcombine.high %v1227, %v1227
        %v1250 = vcombine.high %v1234, %v1234
        %v1251 = vcombine.high %v1241, %v1241
        %v1252 = vcombine.high %v1248, %v1248
        %v1253 = vcombine.high %v1199, %v1199
        %v1255 = vunpack.c.l.s4 1966171168
        %v1256 = vunpack.c.0.s8 %v1255
        %v1257 = vlaneseq
        %v1258 = vshrl.u32 %v1257, 7
        %v1259 = vsub.s32 %v1256, %v1258
        %v1260 = vrot.slane %v1199, %v1259
        %v1262 = vunpack.c.l.s4 1966171168
        %v1263 = vunpack.c.0.s8 %v1262
        %v1264 = vlaneseq
        %v1265 = vshrl.u32 %v1264, 7
        %v1266 = vsub.s32 %v1263, %v1265
        %v1267 = vrot.slane %v1253, %v1266
        %v1268 = vcombine.high %v1260, %v1260
        %v1269 = vcombine.high %v1267, %v1267
        %v1271 = vunpack.c.l.s4 1966171168
        %v1272 = vunpack.c.0.s8 %v1271
        %v1273 = vlaneseq
        %v1274 = vshrl.u32 %v1273, 7
        %v1275 = vsub.s32 %v1272, %v1274
        %v1276 = vrot.slane %v1260, %v1275
        %v1278 = vunpack.c.l.s4 1966171168
        %v1279 = vunpack.c.0.s8 %v1278
        %v1280 = vlaneseq
        %v1281 = vshrl.u32 %v1280, 7
        %v1282 = vsub.s32 %v1279, %v1281
        %v1283 = vrot.slane %v1267, %v1282
        %v1285 = vunpack.c.l.s4 1966171168
        %v1286 = vunpack.c.0.s8 %v1285
        %v1287 = vlaneseq
        %v1288 = vshrl.u32 %v1287, 7
        %v1289 = vsub.s32 %v1286, %v1288
        %v1290 = vrot.slane %v1268, %v1289
        %v1292 = vunpack.c.l.s4 1966171168
        %v1293 = vunpack.c.0.s8 %v1292
        %v1294 = vlaneseq
        %v1295 = vshrl.u32 %v1294, 7
        %v1296 = vsub.s32 %v1293, %v1295
        %v1297 = vrot.slane %v1269, %v1296
        %v1298 = vcombine.high %v1276, %v1276
        %v1299 = vcombine.high %v1283, %v1283
        %v1300 = vcombine.high %v1290, %v1290
        %v1301 = vcombine.high %v1297, %v1297
        %v1302 = vlaneseq
        %v1303 = vshrl.u32 %v1302, 7
        %v1304 = vsub.s32 0, %v1303
        %v1305 = vrot.slane %v1227, %v1304
        %v1306 = vlaneseq
        %v1307 = vshrl.u32 %v1306, 7
        %v1308 = vsub.s32 0, %v1307
        %v1309 = vrot.slane %v1241, %v1308
        %v1310 = vlaneseq
        %v1311 = vshrl.u32 %v1310, 7
        %v1312 = vsub.s32 0, %v1311
        %v1313 = vrot.slane %v1249, %v1312
        %v1314 = vlaneseq
        %v1315 = vshrl.u32 %v1314, 7
        %v1316 = vsub.s32 0, %v1315
        %v1317 = vrot.slane %v1251, %v1316
        %v1318 = vlaneseq
        %v1319 = vshrl.u32 %v1318, 7
        %v1320 = vsub.s32 0, %v1319
        %v1321 = vrot.slane %v1234, %v1320
        %v1322 = vlaneseq
        %v1323 = vshrl.u32 %v1322, 7
        %v1324 = vsub.s32 0, %v1323
        %v1325 = vrot.slane %v1248, %v1324
        %v1326 = vlaneseq
        %v1327 = vshrl.u32 %v1326, 7
        %v1328 = vsub.s32 0, %v1327
        %v1329 = vrot.slane %v1250, %v1328
        %v1330 = vlaneseq
        %v1331 = vshrl.u32 %v1330, 7
        %v1332 = vsub.s32 0, %v1331
        %v1333 = vrot.slane %v1252, %v1332
        %v1334 = vlaneseq
        %v1335 = vshrl.u32 %v1334, 7
        %v1336 = vsub.s32 0, %v1335
        %v1337 = vrot.slane %v1276, %v1336
        %v1338 = vlaneseq
        %v1339 = vshrl.u32 %v1338, 7
        %v1340 = vsub.s32 0, %v1339
        %v1341 = vrot.slane %v1290, %v1340
        %v1342 = vlaneseq
        %v1343 = vshrl.u32 %v1342, 7
        %v1344 = vsub.s32 0, %v1343
        %v1345 = vrot.slane %v1298, %v1344
        %v1346 = vlaneseq
        %v1347 = vshrl.u32 %v1346, 7
        %v1348 = vsub.s32 0, %v1347
        %v1349 = vrot.slane %v1300, %v1348
        %v1350 = vlaneseq
        %v1351 = vshrl.u32 %v1350, 7
        %v1352 = vsub.s32 0, %v1351
        %v1353 = vrot.slane %v1283, %v1352
        %v1354 = vlaneseq
        %v1355 = vshrl.u32 %v1354, 7
        %v1356 = vsub.s32 0, %v1355
        %v1357 = vrot.slane %v1297, %v1356
        %v1358 = vlaneseq
        %v1359 = vshrl.u32 %v1358, 7
        %v1360 = vsub.s32 0, %v1359
        %v1361 = vrot.slane %v1299, %v1360
        %v1362 = vlaneseq
        %v1363 = vshrl.u32 %v1362, 7
        %v1364 = vsub.s32 0, %v1363
        %v1365 = vrot.slane %v1301, %v1364
        %v1382 = vadd.f32 %v1019, %v1305
        %v1383 = vadd.f32 %v1022, %v1305
        %v1384 = vadd.f32 %v1027, %v1309
        %v1385 = vadd.f32 %v1030, %v1309
        %v1386 = vadd.f32 %v1035, %v1313
        %v1387 = vadd.f32 %v1038, %v1313
        %v1388 = vadd.f32 %v1043, %v1317
        %v1389 = vadd.f32 %v1046, %v1317
        %v1390 = vadd.f32 %v1051, %v1321
        %v1391 = vadd.f32 %v1054, %v1321
        %v1392 = vadd.f32 %v1059, %v1325
        %v1393 = vadd.f32 %v1062, %v1325
        %v1394 = vadd.f32 %v1067, %v1329
        %v1395 = vadd.f32 %v1070, %v1329
        %v1396 = vadd.f32 %v1075, %v1333
        %v1397 = vadd.f32 %v1078, %v1333
        %v1398 = vadd.f32 %v1083, %v1337
        %v1399 = vadd.f32 %v1086, %v1337
        %v1400 = vadd.f32 %v1091, %v1341
        %v1401 = vadd.f32 %v1094, %v1341
        %v1402 = vadd.f32 %v1099, %v1345
        %v1403 = vadd.f32 %v1102, %v1345
        %v1404 = vadd.f32 %v1107, %v1349
        %v1405 = vadd.f32 %v1110, %v1349
        %v1406 = vadd.f32 %v1115, %v1353
        %v1407 = vadd.f32 %v1118, %v1353
        %v1408 = vadd.f32 %v1123, %v1357
        %v1409 = vadd.f32 %v1126, %v1357
        %v1410 = vadd.f32 %v1131, %v1361
        %v1411 = vadd.f32 %v1134, %v1361
        %v1412 = vadd.f32 %v1139, %v1365
        %v1413 = vadd.f32 %v1142, %v1365
        %v1414 = vld [vmem:[%s8] sm:$0x1]
        %v1416 = vlaneseq
        %v1417 = vshrl.u32 %v1416, 7
        %v1418 = vsub.s32 0, %v1417
        %v1419 = vrot.slane %v1414, %v1418
        %v1421 = vadd.f32 %v1382, %v1419
        %v1422 = vadd.f32 %v1383, %v1419
        %v1423 = vadd.f32 %v1384, %v1419
        %v1424 = vadd.f32 %v1385, %v1419
        %v1425 = vadd.f32 %v1386, %v1419
        %v1426 = vadd.f32 %v1387, %v1419
        %v1427 = vadd.f32 %v1388, %v1419
        %v1428 = vadd.f32 %v1389, %v1419
        %v1429 = vadd.f32 %v1390, %v1419
        %v1430 = vadd.f32 %v1391, %v1419
        %v1431 = vadd.f32 %v1392, %v1419
        %v1432 = vadd.f32 %v1393, %v1419
        %v1433 = vadd.f32 %v1394, %v1419
        %v1434 = vadd.f32 %v1395, %v1419
        %v1435 = vadd.f32 %v1396, %v1419
        %v1436 = vadd.f32 %v1397, %v1419
        %v1437 = vadd.f32 %v1398, %v1419
        %v1438 = vadd.f32 %v1399, %v1419
        %v1439 = vadd.f32 %v1400, %v1419
        %v1440 = vadd.f32 %v1401, %v1419
        %v1441 = vadd.f32 %v1402, %v1419
        %v1442 = vadd.f32 %v1403, %v1419
        %v1443 = vadd.f32 %v1404, %v1419
        %v1444 = vadd.f32 %v1405, %v1419
        %v1445 = vadd.f32 %v1406, %v1419
        %v1446 = vadd.f32 %v1407, %v1419
        %v1447 = vadd.f32 %v1408, %v1419
        %v1448 = vadd.f32 %v1409, %v1419
        %v1449 = vadd.f32 %v1410, %v1419
        %v1450 = vadd.f32 %v1411, %v1419
        %v1451 = vadd.f32 %v1412, %v1419
        %v1452 = vadd.f32 %v1413, %v1419
        %v1453 = vmax.f32 %v1421, 0.0
        %v1454 = vmax.f32 %v1422, 0.0
        %v1455 = vmax.f32 %v1423, 0.0
        %v1456 = vmax.f32 %v1424, 0.0
        %v1457 = vmax.f32 %v1425, 0.0
        %v1458 = vmax.f32 %v1426, 0.0
        %v1459 = vmax.f32 %v1427, 0.0
        %v1460 = vmax.f32 %v1428, 0.0
        %v1461 = vmax.f32 %v1429, 0.0
        %v1462 = vmax.f32 %v1430, 0.0
        %v1463 = vmax.f32 %v1431, 0.0
        %v1464 = vmax.f32 %v1432, 0.0
        %v1465 = vmax.f32 %v1433, 0.0
        %v1466 = vmax.f32 %v1434, 0.0
        %v1467 = vmax.f32 %v1435, 0.0
        %v1468 = vmax.f32 %v1436, 0.0
        %v1469 = vmax.f32 %v1437, 0.0
        %v1470 = vmax.f32 %v1438, 0.0
        %v1471 = vmax.f32 %v1439, 0.0
        %v1472 = vmax.f32 %v1440, 0.0
        %v1473 = vmax.f32 %v1441, 0.0
        %v1474 = vmax.f32 %v1442, 0.0
        %v1475 = vmax.f32 %v1443, 0.0
        %v1476 = vmax.f32 %v1444, 0.0
        %v1477 = vmax.f32 %v1445, 0.0
        %v1478 = vmax.f32 %v1446, 0.0
        %v1479 = vmax.f32 %v1447, 0.0
        %v1480 = vmax.f32 %v1448, 0.0
        %v1481 = vmax.f32 %v1449, 0.0
        %v1482 = vmax.f32 %v1450, 0.0
        %v1483 = vmax.f32 %v1451, 0.0
        %v1484 = vmax.f32 %v1452, 0.0
        %v1485 = vld [vmem:[%s467] sm:$0xf]
        %v1486 = vld [vmem:[%s467 + $0x4] sm:$0xf]
        %v1487 = vunpack.c.l.bf16 %v1485
        %v1488 = vunpack.c.l.bf16 %v1486
        %v1489 = vxor.u32 %v1487, 2147483648
        %v1490 = vxor.u32 %v1488, 2147483648
        %v1491 = vmul.f32 %v1489, 1.442695
        %v1492 = vpow.pop %v1491
        %v1493 = vmul.f32 %v1490, 1.442695
        %v1494 = vpow.pop %v1493
        %v1495 = vadd.f32 %v1492, 1.0
        %v1496 = vadd.f32 %v1494, 1.0
        %v1497 = vrcp.pop %v1495
        %v1498 = vmul.f32 1.0, %v1497
        %v1499 = vrcp.pop %v1496
        %v1500 = vmul.f32 1.0, %v1499
        %v1501 = vld [vmem:[%s473] sm:$0xff]
        %v1502 = vld [vmem:[%s473 + $0x8] sm:$0xff]
        %v1503 = vmul.f32 %v1498, %v1501
        %v1504 = vmul.f32 %v1500, %v1502
        %v1505 = vlaneseq
        %v1506 = vshrl.u32 %v1505, 7
        %v1507 = vsub.s32 0, %v1506
        %v1508 = vrot.slane %v1503, %v1507
        %1510 = vbcast.lane.b32.xlu0 %v1508, 256
        %v1511 = vpop.permute.xlu0 %1510
        %s1513 = sor.u32 256, 8
        %1514 = vbcast.lane.b32.xlu0 %v1508, %s1513
        %v1515 = vpop.permute.xlu0 %1514
        %v1516 = vlaneseq
        %v1517 = vshrl.u32 %v1516, 7
        %v1518 = vsub.s32 1, %v1517
        %v1519 = vrot.slane %v1503, %v1518
        %1521 = vbcast.lane.b32.xlu0 %v1519, 256
        %v1522 = vpop.permute.xlu0 %1521
        %s1524 = sor.u32 256, 8
        %1525 = vbcast.lane.b32.xlu0 %v1519, %s1524
        %v1526 = vpop.permute.xlu0 %1525
        %v1527 = vlaneseq
        %v1528 = vshrl.u32 %v1527, 7
        %v1529 = vsub.s32 2, %v1528
        %v1530 = vrot.slane %v1503, %v1529
        %1532 = vbcast.lane.b32.xlu0 %v1530, 256
        %v1533 = vpop.permute.xlu0 %1532
        %s1535 = sor.u32 256, 8
        %1536 = vbcast.lane.b32.xlu0 %v1530, %s1535
        %v1537 = vpop.permute.xlu0 %1536
        %v1538 = vlaneseq
        %v1539 = vshrl.u32 %v1538, 7
        %v1540 = vsub.s32 3, %v1539
        %v1541 = vrot.slane %v1503, %v1540
        %1543 = vbcast.lane.b32.xlu0 %v1541, 256
        %v1544 = vpop.permute.xlu0 %1543
        %s1546 = sor.u32 256, 8
        %1547 = vbcast.lane.b32.xlu0 %v1541, %s1546
        %v1548 = vpop.permute.xlu0 %1547
        %v1549 = vlaneseq
        %v1550 = vshrl.u32 %v1549, 7
        %v1551 = vsub.s32 4, %v1550
        %v1552 = vrot.slane %v1503, %v1551
        %1554 = vbcast.lane.b32.xlu0 %v1552, 256
        %v1555 = vpop.permute.xlu0 %1554
        %s1557 = sor.u32 256, 8
        %1558 = vbcast.lane.b32.xlu0 %v1552, %s1557
        %v1559 = vpop.permute.xlu0 %1558
        %v1560 = vlaneseq
        %v1561 = vshrl.u32 %v1560, 7
        %v1562 = vsub.s32 5, %v1561
        %v1563 = vrot.slane %v1503, %v1562
        %1565 = vbcast.lane.b32.xlu0 %v1563, 256
        %v1566 = vpop.permute.xlu0 %1565
        %s1568 = sor.u32 256, 8
        %1569 = vbcast.lane.b32.xlu0 %v1563, %s1568
        %v1570 = vpop.permute.xlu0 %1569
        %v1571 = vlaneseq
        %v1572 = vshrl.u32 %v1571, 7
        %v1573 = vsub.s32 6, %v1572
        %v1574 = vrot.slane %v1503, %v1573
        %1576 = vbcast.lane.b32.xlu0 %v1574, 256
        %v1577 = vpop.permute.xlu0 %1576
        %s1579 = sor.u32 256, 8
        %1580 = vbcast.lane.b32.xlu0 %v1574, %s1579
        %v1581 = vpop.permute.xlu0 %1580
        %v1582 = vlaneseq
        %v1583 = vshrl.u32 %v1582, 7
        %v1584 = vsub.s32 7, %v1583
        %v1585 = vrot.slane %v1503, %v1584
        %1587 = vbcast.lane.b32.xlu0 %v1585, 256
        %v1588 = vpop.permute.xlu0 %1587
        %s1590 = sor.u32 256, 8
        %1591 = vbcast.lane.b32.xlu0 %v1585, %s1590
        %v1592 = vpop.permute.xlu0 %1591
        %v1593 = vlaneseq
        %v1594 = vshrl.u32 %v1593, 7
        %v1595 = vsub.s32 0, %v1594
        %v1596 = vrot.slane %v1504, %v1595
        %1598 = vbcast.lane.b32.xlu0 %v1596, 256
        %v1599 = vpop.permute.xlu0 %1598
        %s1601 = sor.u32 256, 8
        %1602 = vbcast.lane.b32.xlu0 %v1596, %s1601
        %v1603 = vpop.permute.xlu0 %1602
        %v1604 = vlaneseq
        %v1605 = vshrl.u32 %v1604, 7
        %v1606 = vsub.s32 1, %v1605
        %v1607 = vrot.slane %v1504, %v1606
        %1609 = vbcast.lane.b32.xlu0 %v1607, 256
        %v1610 = vpop.permute.xlu0 %1609
        %s1612 = sor.u32 256, 8
        %1613 = vbcast.lane.b32.xlu0 %v1607, %s1612
        %v1614 = vpop.permute.xlu0 %1613
        %v1615 = vlaneseq
        %v1616 = vshrl.u32 %v1615, 7
        %v1617 = vsub.s32 2, %v1616
        %v1618 = vrot.slane %v1504, %v1617
        %1620 = vbcast.lane.b32.xlu0 %v1618, 256
        %v1621 = vpop.permute.xlu0 %1620
        %s1623 = sor.u32 256, 8
        %1624 = vbcast.lane.b32.xlu0 %v1618, %s1623
        %v1625 = vpop.permute.xlu0 %1624
        %v1626 = vlaneseq
        %v1627 = vshrl.u32 %v1626, 7
        %v1628 = vsub.s32 3, %v1627
        %v1629 = vrot.slane %v1504, %v1628
        %1631 = vbcast.lane.b32.xlu0 %v1629, 256
        %v1632 = vpop.permute.xlu0 %1631
        %s1634 = sor.u32 256, 8
        %1635 = vbcast.lane.b32.xlu0 %v1629, %s1634
        %v1636 = vpop.permute.xlu0 %1635
        %v1637 = vlaneseq
        %v1638 = vshrl.u32 %v1637, 7
        %v1639 = vsub.s32 4, %v1638
        %v1640 = vrot.slane %v1504, %v1639
        %1642 = vbcast.lane.b32.xlu0 %v1640, 256
        %v1643 = vpop.permute.xlu0 %1642
        %s1645 = sor.u32 256, 8
        %1646 = vbcast.lane.b32.xlu0 %v1640, %s1645
        %v1647 = vpop.permute.xlu0 %1646
        %v1648 = vlaneseq
        %v1649 = vshrl.u32 %v1648, 7
        %v1650 = vsub.s32 5, %v1649
        %v1651 = vrot.slane %v1504, %v1650
        %1653 = vbcast.lane.b32.xlu0 %v1651, 256
        %v1654 = vpop.permute.xlu0 %1653
        %s1656 = sor.u32 256, 8
        %1657 = vbcast.lane.b32.xlu0 %v1651, %s1656
        %v1658 = vpop.permute.xlu0 %1657
        %v1659 = vlaneseq
        %v1660 = vshrl.u32 %v1659, 7
        %v1661 = vsub.s32 6, %v1660
        %v1662 = vrot.slane %v1504, %v1661
        %1664 = vbcast.lane.b32.xlu0 %v1662, 256
        %v1665 = vpop.permute.xlu0 %1664
        %s1667 = sor.u32 256, 8
        %1668 = vbcast.lane.b32.xlu0 %v1662, %s1667
        %v1669 = vpop.permute.xlu0 %1668
        %v1670 = vlaneseq
        %v1671 = vshrl.u32 %v1670, 7
        %v1672 = vsub.s32 7, %v1671
        %v1673 = vrot.slane %v1504, %v1672
        %1675 = vbcast.lane.b32.xlu0 %v1673, 256
        %v1676 = vpop.permute.xlu0 %1675
        %s1678 = sor.u32 256, 8
        %1679 = vbcast.lane.b32.xlu0 %v1673, %s1678
        %v1680 = vpop.permute.xlu0 %1679
        %v1681 = vmul.f32 %v1453, %v1511
        %v1682 = vmul.f32 %v1454, %v1515
        %v1683 = vmul.f32 %v1455, %v1522
        %v1684 = vmul.f32 %v1456, %v1526
        %v1685 = vmul.f32 %v1457, %v1533
        %v1686 = vmul.f32 %v1458, %v1537
        %v1687 = vmul.f32 %v1459, %v1544
        %v1688 = vmul.f32 %v1460, %v1548
        %v1689 = vmul.f32 %v1461, %v1555
        %v1690 = vmul.f32 %v1462, %v1559
        %v1691 = vmul.f32 %v1463, %v1566
        %v1692 = vmul.f32 %v1464, %v1570
        %v1693 = vmul.f32 %v1465, %v1577
        %v1694 = vmul.f32 %v1466, %v1581
        %v1695 = vmul.f32 %v1467, %v1588
        %v1696 = vmul.f32 %v1468, %v1592
        %v1697 = vmul.f32 %v1469, %v1599
        %v1698 = vmul.f32 %v1470, %v1603
        %v1699 = vmul.f32 %v1471, %v1610
        %v1700 = vmul.f32 %v1472, %v1614
        %v1701 = vmul.f32 %v1473, %v1621
        %v1702 = vmul.f32 %v1474, %v1625
        %v1703 = vmul.f32 %v1475, %v1632
        %v1704 = vmul.f32 %v1476, %v1636
        %v1705 = vmul.f32 %v1477, %v1643
        %v1706 = vmul.f32 %v1478, %v1647
        %v1707 = vmul.f32 %v1479, %v1654
        %v1708 = vmul.f32 %v1480, %v1658
        %v1709 = vmul.f32 %v1481, %v1665
        %v1710 = vmul.f32 %v1482, %v1669
        %v1711 = vmul.f32 %v1483, %v1676
        %v1712 = vmul.f32 %v1484, %v1680
        %v1713 = vadd.f32 %v1681, %v1682
        %v1714 = vrot.slane %v1713, 4
        %v1715 = vadd.f32 %v1713, %v1714
        %v1716 = vrot.slane %v1715, 2
        %v1717 = vadd.f32 %v1715, %v1716
        %v1718 = vrot.slane %v1717, 1
        %v1719 = vadd.f32 %v1717, %v1718
        %v1720 = vadd.f32 %v1683, %v1684
        %v1721 = vrot.slane %v1720, 4
        %v1722 = vadd.f32 %v1720, %v1721
        %v1723 = vrot.slane %v1722, 2
        %v1724 = vadd.f32 %v1722, %v1723
        %v1725 = vrot.slane %v1724, 1
        %v1726 = vadd.f32 %v1724, %v1725
        %v1727 = vadd.f32 %v1685, %v1686
        %v1728 = vrot.slane %v1727, 4
        %v1729 = vadd.f32 %v1727, %v1728
        %v1730 = vrot.slane %v1729, 2
        %v1731 = vadd.f32 %v1729, %v1730
        %v1732 = vrot.slane %v1731, 1
        %v1733 = vadd.f32 %v1731, %v1732
        %v1734 = vadd.f32 %v1687, %v1688
        %v1735 = vrot.slane %v1734, 4
        %v1736 = vadd.f32 %v1734, %v1735
        %v1737 = vrot.slane %v1736, 2
        %v1738 = vadd.f32 %v1736, %v1737
        %v1739 = vrot.slane %v1738, 1
        %v1740 = vadd.f32 %v1738, %v1739
        %v1741 = vadd.f32 %v1689, %v1690
        %v1742 = vrot.slane %v1741, 4
        %v1743 = vadd.f32 %v1741, %v1742
        %v1744 = vrot.slane %v1743, 2
        %v1745 = vadd.f32 %v1743, %v1744
        %v1746 = vrot.slane %v1745, 1
        %v1747 = vadd.f32 %v1745, %v1746
        %v1748 = vadd.f32 %v1691, %v1692
        %v1749 = vrot.slane %v1748, 4
        %v1750 = vadd.f32 %v1748, %v1749
        %v1751 = vrot.slane %v1750, 2
        %v1752 = vadd.f32 %v1750, %v1751
        %v1753 = vrot.slane %v1752, 1
        %v1754 = vadd.f32 %v1752, %v1753
        %v1755 = vadd.f32 %v1693, %v1694
        %v1756 = vrot.slane %v1755, 4
        %v1757 = vadd.f32 %v1755, %v1756
        %v1758 = vrot.slane %v1757, 2
        %v1759 = vadd.f32 %v1757, %v1758
        %v1760 = vrot.slane %v1759, 1
        %v1761 = vadd.f32 %v1759, %v1760
        %v1762 = vadd.f32 %v1695, %v1696
        %v1763 = vrot.slane %v1762, 4
        %v1764 = vadd.f32 %v1762, %v1763
        %v1765 = vrot.slane %v1764, 2
        %v1766 = vadd.f32 %v1764, %v1765
        %v1767 = vrot.slane %v1766, 1
        %v1768 = vadd.f32 %v1766, %v1767
        %v1769 = vadd.f32 %v1697, %v1698
        %v1770 = vrot.slane %v1769, 4
        %v1771 = vadd.f32 %v1769, %v1770
        %v1772 = vrot.slane %v1771, 2
        %v1773 = vadd.f32 %v1771, %v1772
        %v1774 = vrot.slane %v1773, 1
        %v1775 = vadd.f32 %v1773, %v1774
        %v1776 = vadd.f32 %v1699, %v1700
        %v1777 = vrot.slane %v1776, 4
        %v1778 = vadd.f32 %v1776, %v1777
        %v1779 = vrot.slane %v1778, 2
        %v1780 = vadd.f32 %v1778, %v1779
        %v1781 = vrot.slane %v1780, 1
        %v1782 = vadd.f32 %v1780, %v1781
        %v1783 = vadd.f32 %v1701, %v1702
        %v1784 = vrot.slane %v1783, 4
        %v1785 = vadd.f32 %v1783, %v1784
        %v1786 = vrot.slane %v1785, 2
        %v1787 = vadd.f32 %v1785, %v1786
        %v1788 = vrot.slane %v1787, 1
        %v1789 = vadd.f32 %v1787, %v1788
        %v1790 = vadd.f32 %v1703, %v1704
        %v1791 = vrot.slane %v1790, 4
        %v1792 = vadd.f32 %v1790, %v1791
        %v1793 = vrot.slane %v1792, 2
        %v1794 = vadd.f32 %v1792, %v1793
        %v1795 = vrot.slane %v1794, 1
        %v1796 = vadd.f32 %v1794, %v1795
        %v1797 = vadd.f32 %v1705, %v1706
        %v1798 = vrot.slane %v1797, 4
        %v1799 = vadd.f32 %v1797, %v1798
        %v1800 = vrot.slane %v1799, 2
        %v1801 = vadd.f32 %v1799, %v1800
        %v1802 = vrot.slane %v1801, 1
        %v1803 = vadd.f32 %v1801, %v1802
        %v1804 = vadd.f32 %v1707, %v1708
        %v1805 = vrot.slane %v1804, 4
        %v1806 = vadd.f32 %v1804, %v1805
        %v1807 = vrot.slane %v1806, 2
        %v1808 = vadd.f32 %v1806, %v1807
        %v1809 = vrot.slane %v1808, 1
        %v1810 = vadd.f32 %v1808, %v1809
        %v1811 = vadd.f32 %v1709, %v1710
        %v1812 = vrot.slane %v1811, 4
        %v1813 = vadd.f32 %v1811, %v1812
        %v1814 = vrot.slane %v1813, 2
        %v1815 = vadd.f32 %v1813, %v1814
        %v1816 = vrot.slane %v1815, 1
        %v1817 = vadd.f32 %v1815, %v1816
        %v1818 = vadd.f32 %v1711, %v1712
        %v1819 = vrot.slane %v1818, 4
        %v1820 = vadd.f32 %v1818, %v1819
        %v1821 = vrot.slane %v1820, 2
        %v1822 = vadd.f32 %v1820, %v1821
        %v1823 = vrot.slane %v1822, 1
        %v1824 = vadd.f32 %v1822, %v1823
        %v1825 = vld [vmem:[%s9] sm:$0xff]
        %v1826 = vld [vmem:[%s9 + $0x8] sm:$0xff]
        %v1827 = vld [vmem:[%s9 + $0x10] sm:$0xff]
        %v1828 = vld [vmem:[%s9 + $0x18] sm:$0xff]
        %v1829 = vld [vmem:[%s9 + $0x20] sm:$0xff]
        %v1830 = vld [vmem:[%s9 + $0x28] sm:$0xff]
        %v1831 = vld [vmem:[%s9 + $0x30] sm:$0xff]
        %v1832 = vld [vmem:[%s9 + $0x38] sm:$0xff]
        %v1833 = vld [vmem:[%s9 + $0x40] sm:$0xff]
        %v1834 = vld [vmem:[%s9 + $0x48] sm:$0xff]
        %v1835 = vld [vmem:[%s9 + $0x50] sm:$0xff]
        %v1836 = vld [vmem:[%s9 + $0x58] sm:$0xff]
        %v1837 = vld [vmem:[%s9 + $0x60] sm:$0xff]
        %v1838 = vld [vmem:[%s9 + $0x68] sm:$0xff]
        %v1839 = vld [vmem:[%s9 + $0x70] sm:$0xff]
        %v1840 = vld [vmem:[%s9 + $0x78] sm:$0xff]
        %v1841 = vld [vmem:[%s10] sm:$0x1]
        %v1843 = vlaneseq
        %v1844 = vshrl.u32 %v1843, 7
        %v1845 = vsub.s32 0, %v1844
        %v1846 = vrot.slane %v1841, %v1845
        %vm1864 = vcmask 1041409
        %v1865 = vsel %vm1864, %v1726, %v1719
        %vm1866 = vcmask 1042434
        %v1867 = vsel %vm1866, %v1733, %v1865
        %vm1868 = vcmask 1043459
        %v1869 = vsel %vm1868, %v1740, %v1867
        %vm1870 = vcmask 1044484
        %v1871 = vsel %vm1870, %v1747, %v1869
        %vm1872 = vcmask 1045509
        %v1873 = vsel %vm1872, %v1754, %v1871
        %vm1874 = vcmask 1046534
        %v1875 = vsel %vm1874, %v1761, %v1873
        %vm1876 = vcmask 1047559
        %v1877 = vsel %vm1876, %v1768, %v1875
        %v1878 = vsel %vm1864, %v1782, %v1775
        %v1879 = vsel %vm1866, %v1789, %v1878
        %v1880 = vsel %vm1868, %v1796, %v1879
        %v1881 = vsel %vm1870, %v1803, %v1880
        %v1882 = vsel %vm1872, %v1810, %v1881
        %v1883 = vsel %vm1874, %v1817, %v1882
        %v1884 = vsel %vm1876, %v1824, %v1883
        %1887 = vmatprep.subr.mxu0 0.0
        %1888 = vmatpush1.msra.mxu0 %v1840
        %1889 = vmatprep.subr.mxu0 0.0
        %1890 = vmatpush1.msra.mxu0 %v1839
        %1891 = vmatprep.subr.mxu0 0.0
        %1892 = vmatpush1.msra.mxu0 %v1838
        %1893 = vmatprep.subr.mxu0 0.0
        %1894 = vmatpush1.msra.mxu0 %v1837
        %1895 = vmatprep.subr.mxu0 0.0
        %1896 = vmatpush1.msra.mxu0 %v1836
        %1897 = vmatprep.subr.mxu0 0.0
        %1898 = vmatpush1.msra.mxu0 %v1835
        %1899 = vmatprep.subr.mxu0 0.0
        %1900 = vmatpush1.msra.mxu0 %v1834
        %1901 = vmatprep.subr.mxu0 0.0
        %1902 = vmatpush1.msra.mxu0 %v1833
        %1903 = vmatprep.subr.mxu0 0.0
        %1904 = vmatpush1.msra.mxu0 %v1832
        %1905 = vmatprep.subr.mxu0 0.0
        %1906 = vmatpush1.msra.mxu0 %v1831
        %1907 = vmatprep.subr.mxu0 0.0
        %1908 = vmatpush1.msra.mxu0 %v1830
        %1909 = vmatprep.subr.mxu0 0.0
        %1910 = vmatpush1.msra.mxu0 %v1829
        %1911 = vmatprep.subr.mxu0 0.0
        %1912 = vmatpush1.msra.mxu0 %v1828
        %1913 = vmatprep.subr.mxu0 0.0
        %1914 = vmatpush1.msra.mxu0 %v1827
        %1915 = vmatprep.subr.mxu0 0.0
        %1916 = vmatpush1.msra.mxu0 %v1826
        %1917 = vmatprep.subr.mxu0 0.0
        %1918 = vmatpush1.msra.mxu0 %v1825
        %1919 = vmatprep.subr.mxu0 0.0
        %1920 = vmatpush2.msra.mxu0 0.0
        %1921 = vmatprep.subr.mxu0 0.0
        %1922 = vmatpush2.msra.mxu0 0.0
        %1923 = vmatprep.subr.mxu0 0.0
        %1924 = vmatpush2.msra.mxu0 0.0
        %1925 = vmatprep.subr.mxu0 0.0
        %1926 = vmatpush2.msra.mxu0 0.0
        %1927 = vmatprep.subr.mxu0 0.0
        %1928 = vmatpush2.msra.mxu0 0.0
        %1929 = vmatprep.subr.mxu0 0.0
        %1930 = vmatpush2.msra.mxu0 0.0
        %1931 = vmatprep.subr.mxu0 0.0
        %1932 = vmatpush2.msra.mxu0 0.0
        %1933 = vmatprep.subr.mxu0 0.0
        %1934 = vmatpush2.msra.mxu0 0.0
        %1935 = vmatprep.subr.mxu0 0.0
        %1936 = vmatpush2.msra.mxu0 0.0
        %1937 = vmatprep.subr.mxu0 0.0
        %1938 = vmatpush2.msra.mxu0 0.0
        %1939 = vmatprep.subr.mxu0 0.0
        %1940 = vmatpush2.msra.mxu0 0.0
        %1941 = vmatprep.subr.mxu0 0.0
        %1942 = vmatpush2.msra.mxu0 0.0
        %1943 = vmatprep.subr.mxu0 0.0
        %1944 = vmatpush2.msra.mxu0 0.0
        %1945 = vmatprep.subr.mxu0 0.0
        %1946 = vmatpush2.msra.mxu0 0.0
        %1947 = vmatprep.subr.mxu0 0.0
        %1948 = vmatpush2.msra.mxu0 0.0
        %1949 = vmatprep.subr.mxu0 0.0
        %1950 = vmatpush2.msra.mxu0 0.0
        %1951 = vmatprep.mubr.f32.mxu0 0.0
        %1952 = vmatmul.mubr.f32.gmra.mxu0 %v1877
        %v1953 = vpop.f32.mrf.mxu0
        %v1954 = vadd.f32 %v1846, %v1953
        %v1955 = vpop.f32.mrf.mxu0
        %1956 = vmatprep.mubr.f32.mxu0 0.0
        %1957 = vmatmul.mubr.f32.gmra.mxu0 %v1884
        %v1958 = vpop.f32.mrf.mxu0
        %v1959 = vadd.f32 %v1846, %v1958
        %v1960 = vpop.f32.mrf.mxu0
        %1961 = vdwg.mxu0
        %1962 = vst [vmem:[%s444] sm:$0xff] %v1954
        %1963 = vst [vmem:[%s444 + $0x8] sm:$0xff] %v1959
        %s1964 = sand.u32 %s289, 1
        %s1965 = scalar_lea.sflag [#allocation3], %s1964
        %s1966 = sand.u32 %s289, 1
        %s1967 = smul.addr %s1966, 16
        %s1968 = scalar_lea.vmem [#allocation2], %s1967
        // Predicated region
        $region65: #{tpu_custom_call.1} parent=63 // pred_check
          %p1969 = pneg %p299
        $region66: #{tpu_custom_call.1} parent=63 // pred_check_branch
          %1971 = sbr.rel (%p1969) target = $region68
        $region67: #{tpu_custom_call.1} parent=63 // pred_region
          %s1972 = smul.u32 2, %s25
          %s1974 = ssub.s32 256, 256
          %1975 = vsyncadd %s1965, %s1974
          %s1976 = smul.addr %s1972, 128
          %s1977 = scalar_lea.hbm %s11, %s1976
          %s1978 = sshll.u32 %s1968, 4
          %s1979 = int_to_ptr.vmem [resolvable:$true] %s1978
          %1984 = dma.vmem_to_hbm [thread:$0]  %s1979, 256, %s1977, %s1965, 128, 128, 8
        $region68: #{tpu_custom_call.1} parent=63 // pred_fallthru
          _
      $region64: #{tpu_custom_call.1} parent=5 // pred_fallthru
        _
      %p1985 = scmp.le.s32.totalorder 2, %s20
      // Predicated region
      $region69: #{tpu_custom_call.1} parent=5 // pred_check
        %p1986 = pneg %p1985
      $region70: #{tpu_custom_call.1} parent=5 // pred_check_branch
        %1988 = sbr.rel (%p1986) target = $region72
      $region71: #{tpu_custom_call.1} parent=5 // pred_region
        %s1989 = ssub.s32 %s20, 2
        // Predicated region
        $region73: #{tpu_custom_call.1} parent=71 // pred_check
          %p1990 = pneg %p305
        $region74: #{tpu_custom_call.1} parent=71 // pred_check_branch
          %1992 = sbr.rel (%p1990) target = $region76
        $region75: #{tpu_custom_call.1} parent=71 // pred_region
          %s1993 = sand.u32 %s290, 1
          %s1994 = scalar_lea.sflag [#allocation3], %s1993
          %s1995 = sand.u32 %s290, 1
          %s1996 = smul.addr %s1995, 16
          %s1997 = scalar_lea.vmem [#allocation2], %s1996
          %1998 = dma.done %s1994, 256
        $region76: #{tpu_custom_call.1} parent=71 // pred_fallthru
          _
      $region72: #{tpu_custom_call.1} parent=5 // pred_fallthru
        _
    $region6: #{tpu_custom_call.1} parent=1 // loop_footer
      %s24 = sadd.s32 1, %s20
    $region7: #{tpu_custom_call.1} parent=1 // loop_footer_branch
      %19 = sbr.rel target = $region3
    $region8: #{tpu_custom_call.1} parent=1 // loop_exit
      _
    %1999 = vsyncpa [#allocation3], 1
    %s2000 = scalar_lea.sflag [#allocation3], 1
    %2001 = vsyncpa %s2000, 1

</llo_original>
